<compile_context>
chip_gen: v5e
topology: v5e:2x2
jax: 0.10.0
libtpu: 0.0.40
codegen_flags: <defaults>
</compile_context>

<pallas_src>
import functools

import jax
import jax.numpy as jnp
from jax import lax
from jax.experimental import pallas as pl
from jax.experimental.pallas import tpu as pltpu


# ----------------------------------------------------------------------------
# Kernel 1: fused q|k|v projection  (q pre-scaled via the weights)
# ----------------------------------------------------------------------------
def _qkv_kernel(x_ref, wt_ref, o_ref):
    o_ref[...] = jnp.dot(x_ref[...].astype(jnp.bfloat16), wt_ref[...],
                         preferred_element_type=jnp.float32).astype(o_ref.dtype)


def _qkv_projection(x, w_qkv_t, *, row_tile):
    n, d = x.shape
    d3 = w_qkv_t.shape[1]
    grid = (pl.cdiv(n, row_tile),)
    return pl.pallas_call(
        _qkv_kernel,
        out_shape=jax.ShapeDtypeStruct((n, d3), jnp.bfloat16),
        grid_spec=pltpu.PrefetchScalarGridSpec(
            num_scalar_prefetch=0,
            grid=grid,
            in_specs=[pl.BlockSpec((row_tile, d), lambda i: (i, 0)),
                      pl.BlockSpec((d, d3), lambda i: (0, 0))],
            out_specs=pl.BlockSpec((row_tile, d3), lambda i: (i, 0)),
        ),
        compiler_params=pltpu.CompilerParams(
            dimension_semantics=("parallel",),
            vmem_limit_bytes=64 * 1024 * 1024,
        ),
        cost_estimate=pl.CostEstimate(
            flops=2 * n * d * d3, transcendentals=0,
            bytes_accessed=n * d * 4 + d * d3 * 2 + n * d3 * 2),
    )(x, w_qkv_t)


# ----------------------------------------------------------------------------
# Kernel 2: sparse edge attention, vectorized over edge tiles
# ----------------------------------------------------------------------------
def _edge_attn_kernel(src_row_ref, src_col_ref, dest_col_ref, qkv_ref,
                      hm_dh_ref, hm_hd_ref, o_ref, den_ref,
                      *, d, n_nodes, e_tile):
    t = pl.program_id(0)

    @pl.when(t == 0)
    def _():
        o_ref[...] = jnp.zeros_like(o_ref)        # numerator accumulator (N, d)
        den_ref[...] = jnp.zeros_like(den_ref)    # denominator accumulator (N, H)

    src_col = src_col_ref[...]                    # (E_TILE, 1) int32
    dest_col = dest_col_ref[...]                  # (E_TILE, 1) int32
    src_row = src_row_ref[0]                      # (1, E_TILE) int32

    # Gather one-hots (exact: one-hot rows pick bf16 table rows, f32 accumulate).
    # Padded edges carry the sentinel id n_nodes -> all-zero one-hot rows/columns.
    node_g = lax.broadcasted_iota(jnp.int32, (e_tile, n_nodes), 1)
    oh_q = (node_g == src_col).astype(jnp.bfloat16)       # (E_TILE, N)
    oh_kv = (node_g == dest_col).astype(jnp.bfloat16)     # (E_TILE, N)

    qs = jnp.dot(oh_q, qkv_ref[:, :d],
                 preferred_element_type=jnp.float32)      # (E_TILE, d)
    kvs = jnp.dot(oh_kv, qkv_ref[:, d:],
                  preferred_element_type=jnp.float32)     # (E_TILE, 2d)
    ks = kvs[:, :d]
    vs = kvs[:, d:]

    # Per-head logits via the block-diagonal head mask (no per-head loop).
    logits = jnp.dot(qs * ks, hm_dh_ref[...],
                     preferred_element_type=jnp.float32)  # (E_TILE, H)
    # Plain exp: matches the module's scatter_softmax (no max subtraction).
    ex = jnp.exp(logits)                                  # (E_TILE, H)
    w_full = jnp.dot(ex, hm_hd_ref[...],
                     preferred_element_type=jnp.float32)  # (E_TILE, d)
    wv = w_full * vs                                      # (E_TILE, d)

    # Segment scatter into the full-N resident accumulators (order-independent,
    # so cross-tile segments need no carry and edges need not be sorted).
    node_s = lax.broadcasted_iota(jnp.int32, (n_nodes, e_tile), 0)
    oh_scatter = (node_s == src_row).astype(jnp.float32)  # (N, E_TILE)

    o_ref[...] += jnp.dot(oh_scatter, wv, preferred_element_type=jnp.float32)
    den_ref[...] += jnp.dot(oh_scatter, ex, preferred_element_type=jnp.float32)

    @pl.when(t == pl.num_programs(0) - 1)
    def _():
        den_full = jnp.dot(den_ref[...], hm_hd_ref[...],
                           preferred_element_type=jnp.float32)      # (N, d)
        # Exact reciprocal; nodes with no out-edges get zero rows (matches the
        # reference scatter_sum semantics).
        inv = jnp.where(den_full > 0.0, 1.0 / den_full, 0.0)
        o_ref[...] = o_ref[...] * inv


def _edge_attention(qkv, src, dest, *, n_nodes, nheads, edge_tile):
    d3 = qkv.shape[1]
    d = d3 // 3
    fh = d // nheads
    n_edges = src.shape[0]

    edge_tile = min(edge_tile, max(n_edges, 8))
    edge_tile = max(8, ((edge_tile + 7) // 8) * 8)      # keep sublane-aligned
    num_tiles = pl.cdiv(n_edges, edge_tile)
    e_pad = num_tiles * edge_tile

    src = src.astype(jnp.int32)
    dest = dest.astype(jnp.int32)
    pad = e_pad - n_edges
    if pad:
        sent = jnp.full((pad,), n_nodes, jnp.int32)     # out-of-range sentinel
        src = jnp.concatenate([src, sent])
        dest = jnp.concatenate([dest, sent])

    src_row = src.reshape(num_tiles, 1, edge_tile)      # row orientation (scatter)
    src_col = src.reshape(e_pad, 1)                     # column orientation (gather)
    dest_col = dest.reshape(e_pad, 1)

    # Block-diagonal head masks: hm_dh[f, h] = 1 iff feature f belongs to head h.
    head_of_feat = jnp.arange(d, dtype=jnp.int32) // fh
    hm_dh = (head_of_feat[:, None]
             == jnp.arange(nheads, dtype=jnp.int32)[None, :]).astype(jnp.float32)
    hm_hd = hm_dh.T                                     # (H, d)

    kernel = functools.partial(_edge_attn_kernel, d=d, n_nodes=n_nodes,
                               e_tile=edge_tile)
    flops = e_pad * (8 * n_nodes * d + 4 * nheads * d) + 2 * n_nodes * nheads * d
    bytes_accessed = (n_nodes * d3 * 2 + n_nodes * d * 4 + 3 * e_pad * 4
                      + 2 * d * nheads * 4)
    return pl.pallas_call(
        kernel,
        out_shape=jax.ShapeDtypeStruct((n_nodes, d), jnp.float32),
        grid_spec=pltpu.PrefetchScalarGridSpec(
            num_scalar_prefetch=0,
            grid=(num_tiles,),
            in_specs=[
                pl.BlockSpec((1, 1, edge_tile), lambda t: (t, 0, 0)),   # src (row)
                pl.BlockSpec((edge_tile, 1), lambda t: (t, 0)),         # src (col)
                pl.BlockSpec((edge_tile, 1), lambda t: (t, 0)),         # dest (col)
                pl.BlockSpec((n_nodes, d3), lambda t: (0, 0)),          # qkv table
                pl.BlockSpec((d, nheads), lambda t: (0, 0)),            # head mask
                pl.BlockSpec((nheads, d), lambda t: (0, 0)),            # head mask^T
            ],
            out_specs=pl.BlockSpec((n_nodes, d), lambda t: (0, 0)),
            scratch_shapes=[pltpu.VMEM((n_nodes, nheads), jnp.float32)],
        ),
        compiler_params=pltpu.CompilerParams(
            dimension_semantics=("arbitrary",),   # resident accumulators
            vmem_limit_bytes=64 * 1024 * 1024,
        ),
        cost_estimate=pl.CostEstimate(flops=flops,
                                      transcendentals=e_pad * nheads,
                                      bytes_accessed=bytes_accessed),
    )(src_row, src_col, dest_col, qkv, hm_dh, hm_hd)


# ----------------------------------------------------------------------------
# Kernel 3: residual + LayerNorm1 + MLP (Linear-ReLU-Linear) + residual + LayerNorm2
# ----------------------------------------------------------------------------
def _post_kernel(x_ref, a_ref, w1t_ref, w2t_ref, vec_ref, o_ref, *, eps):
    vecs = vec_ref[...]
    g1, be1 = vecs[0:1, :], vecs[1:2, :]
    b1, b2 = vecs[2:3, :], vecs[3:4, :]
    g2, be2 = vecs[4:5, :], vecs[5:6, :]

    y = x_ref[...] + a_ref[...]
    mu = jnp.mean(y, axis=-1, keepdims=True)
    yc = y - mu
    var = jnp.mean(yc * yc, axis=-1, keepdims=True)
    y = yc * lax.rsqrt(var + eps) * g1 + be1

    hid = jnp.dot(y.astype(jnp.bfloat16), w1t_ref[...],
                  preferred_element_type=jnp.float32) + b1
    hid = jnp.maximum(hid, 0.0)
    z = jnp.dot(hid.astype(jnp.bfloat16), w2t_ref[...],
                preferred_element_type=jnp.float32) + b2

    z = y + z
    mu2 = jnp.mean(z, axis=-1, keepdims=True)
    zc = z - mu2
    var2 = jnp.mean(zc * zc, axis=-1, keepdims=True)
    o_ref[...] = (zc * lax.rsqrt(var2 + eps) * g2 + be2).astype(o_ref.dtype)


def _post_block(x, attn, w1t, w2t, vecs, *, row_tile, eps=1e-5):
    n, d = x.shape
    grid = (pl.cdiv(n, row_tile),)
    row_spec = pl.BlockSpec((row_tile, d), lambda i: (i, 0))
    w_spec = pl.BlockSpec((d, d), lambda i: (0, 0))
    vec_spec = pl.BlockSpec((8, d), lambda i: (0, 0))
    kernel = functools.partial(_post_kernel, eps=eps)
    return pl.pallas_call(
        kernel,
        out_shape=jax.ShapeDtypeStruct((n, d), jnp.float32),
        grid_spec=pltpu.PrefetchScalarGridSpec(
            num_scalar_prefetch=0,
            grid=grid,
            in_specs=[row_spec, row_spec, w_spec, w_spec, vec_spec],
            out_specs=row_spec,
        ),
        compiler_params=pltpu.CompilerParams(
            dimension_semantics=("parallel",),
            vmem_limit_bytes=64 * 1024 * 1024,
        ),
        cost_estimate=pl.CostEstimate(
            flops=4 * n * d * d + 12 * n * d, transcendentals=4 * n,
            bytes_accessed=3 * n * d * 4 + 2 * d * d * 2 + 8 * d * 4),
    )(x, attn, w1t, w2t, vecs)


# ----------------------------------------------------------------------------
# Host-side preprocessing + full forward
# ----------------------------------------------------------------------------
def _preprocess(params, nheads):
    w_qkv = params["w_qkv"]                       # (3d, d): rows = [Wq; Wk; Wv]
    d = w_qkv.shape[1]
    fh = d // nheads
    scaling = float(fh) ** (-0.5)
    wq_t = w_qkv[:d].T * scaling                  # scaling folded into Wq^T
    wk_t = w_qkv[d:2 * d].T
    wv_t = w_qkv[2 * d:].T
    w_qkv_t = jnp.concatenate([wq_t, wk_t, wv_t], axis=1).astype(jnp.bfloat16)
    w1t = params["w1"].T.astype(jnp.bfloat16)
    w2t = params["w2"].T.astype(jnp.bfloat16)
    zeros = jnp.zeros((d,), jnp.float32)
    vecs = jnp.stack([params["ln1_g"], params["ln1_b"],
                      params["b1"], params["b2"],
                      params["ln2_g"], params["ln2_b"],
                      zeros, zeros]).astype(jnp.float32)          # (8, d)
    return w_qkv_t, w1t, w2t, vecs


@functools.partial(jax.jit, static_argnames=("nheads", "edge_tile", "row_tile"))
def transformer_block_sparse(x, params, src, dest, *, nheads,
                             edge_tile=256, row_tile=256):
    """Pallas forward of TransformerBlockSparse.

    x: (N, d) f32; src/dest: (E,) int32 with source ids in [0, N) (any order).
    `batch` from the PyTorch forward is unused there and not an input here.
    """
    n, d = x.shape
    x = x.astype(jnp.float32)
    w_qkv_t, w1t, w2t, vecs = _preprocess(params, nheads)
    row_tile = min(row_tile, n)

    qkv = _qkv_projection(x, w_qkv_t, row_tile=row_tile)
    attn = _edge_attention(qkv, src, dest, n_nodes=n, nheads=nheads,
                           edge_tile=edge_tile)
    return _post_block(x, attn, w1t, w2t, vecs, row_tile=row_tile)


# ----------------------------------------------------------------------------
# Pure-JAX reference (mirrors the kernel's bf16 matmul-input casts so that the
# comparison isolates kernel correctness).
# ----------------------------------------------------------------------------
def _reference_forward(x, params, src, dest, *, nheads, eps=1e-5):
    n, d = x.shape
    h = nheads
    fh = d // h
    w_qkv_t, w1t, w2t, vecs = _preprocess(params, nheads)
    g1, be1, b1, b2, g2, be2 = (vecs[0], vecs[1], vecs[2],
                                vecs[3], vecs[4], vecs[5])
    xb = x.astype(jnp.bfloat16)
    qkv = jnp.dot(xb, w_qkv_t,
                  preferred_element_type=jnp.float32).astype(jnp.bfloat16)
    q, k, v = qkv[:, :d], qkv[:, d:2 * d], qkv[:, 2 * d:]

    qs = q[src].astype(jnp.float32).reshape(-1, h, fh)
    ks = k[dest].astype(jnp.float32).reshape(-1, h, fh)
    vs = v[dest].astype(jnp.float32).reshape(-1, h, fh)
    aw = jnp.sum(qs * ks, axis=-1)                                    # (E, H)
    ex = jnp.exp(aw)
    den = jax.ops.segment_sum(ex, src, num_segments=n)[src]
    w = ex / den
    attn = jax.ops.segment_sum(w[:, :, None] * vs, src,
                               num_segments=n).reshape(n, d)

    def ln(t, g, b):
        mu = jnp.mean(t, axis=-1, keepdims=True)
        tc = t - mu
        var = jnp.mean(tc * tc, axis=-1, keepdims=True)
        return tc * lax.rsqrt(var + eps) * g + b

    y = ln(x + attn, g1, be1)
    hid = jnp.maximum(jnp.dot(y.astype(jnp.bfloat16), w1t,
                              preferred_element_type=jnp.float32) + b1, 0.0)
    z = jnp.dot(hid.astype(jnp.bfloat16), w2t,
                preferred_element_type=jnp.float32) + b2
    return ln(y + z, g2, be2)


# ----------------------------------------------------------------------------
if __name__ == "__main__":
    # Small version of the module (module default d=512, h=8): d=128, h=4,
    # two fully-connected graphs of 4 nodes -> N=8 nodes, E=32 edges.
    d, h = 128, 4
    n_per_graph, n_graphs = 4, 2
    n = n_per_graph * n_graphs

    src_list, dest_list = [], []
    for g in range(n_graphs):
        base = g * n_per_graph
        for i in range(n_per_graph):
            for j in range(n_per_graph):
                src_list.append(base + i)
                dest_list.append(base + j)
    src = jnp.array(src_list, dtype=jnp.int32)
    dest = jnp.array(dest_list, dtype=jnp.int32)

    key = jax.random.PRNGKey(0)
    ks = jax.random.split(key, 10)
    bound = 1.0 / (d ** 0.5)
    x = jax.random.uniform(ks[0], (n, d), dtype=jnp.float32)
    params = {
        "w_qkv": jax.random.uniform(ks[1], (3 * d, d), minval=-bound, maxval=bound,
                                    dtype=jnp.float32),
        "w1": jax.random.uniform(ks[2], (d, d), minval=-bound, maxval=bound,
                                 dtype=jnp.float32),
        "b1": jax.random.uniform(ks[3], (d,), minval=-bound, maxval=bound,
                                 dtype=jnp.float32),
        "w2": jax.random.uniform(ks[4], (d, d), minval=-bound, maxval=bound,
                                 dtype=jnp.float32),
        "b2": jax.random.uniform(ks[5], (d,), minval=-bound, maxval=bound,
                                 dtype=jnp.float32),
        "ln1_g": 1.0 + 0.1 * jax.random.normal(ks[6], (d,), dtype=jnp.float32),
        "ln1_b": 0.1 * jax.random.normal(ks[7], (d,), dtype=jnp.float32),
        "ln2_g": 1.0 + 0.1 * jax.random.normal(ks[8], (d,), dtype=jnp.float32),
        "ln2_b": 0.1 * jax.random.normal(ks[9], (d,), dtype=jnp.float32),
    }

    # edge_tile=16 deliberately exercises multiple edge tiles (segments straddling
    # tile boundaries are handled by the full-N resident accumulators).
    out = transformer_block_sparse(x, params, src, dest, nheads=h, edge_tile=16)
    out = jax.block_until_ready(out)

    ref = _reference_forward(x, params, src, dest, nheads=h)
    assert out.shape == (n, d), out.shape
    err = float(jnp.max(jnp.abs(out - ref)))
    assert err < 2e-2, f"max abs error vs reference: {err}"
    print("KERNEL_OK")
</pallas_src>

<mosaic_0001>
module attributes {stable_mosaic.version = 11 : i64} {
  func.func @_qkv_kernel(%arg0: i32, %arg1: memref<8x128xf32, #tpu.memory_space<vmem>>, %arg2: memref<128x384xbf16, #tpu.memory_space<vmem>>, %arg3: memref<8x384xbf16, #tpu.memory_space<vmem>>) attributes {dimension_semantics = [#tpu.dimension_semantics<parallel>], iteration_bounds = array<i64: 1>, scalar_prefetch = 0 : i64, scratch_operands = 0 : i64, tpu.core_type = #tpu.core_type<tc>, window_params = [{transform_indices = @transform_0, window_bounds = array<i64: 8, 128>}, {pipeline_mode = #tpu.pipeline_mode<synchronous>, transform_indices = @transform_1, window_bounds = array<i64: 128, 384>}, {transform_indices = @transform_2, window_bounds = array<i64: 8, 384>}]} {
    %c0 = arith.constant 0 : index
    %c0_0 = arith.constant 0 : index
    %0 = vector.load %arg1[%c0, %c0_0] : memref<8x128xf32, #tpu.memory_space<vmem>>, vector<8x128xf32>
    %1 = arith.truncf %0 : vector<8x128xf32> to vector<8x128xbf16>
    %c0_1 = arith.constant 0 : index
    %c0_2 = arith.constant 0 : index
    %2 = vector.load %arg2[%c0_1, %c0_2] : memref<128x384xbf16, #tpu.memory_space<vmem>>, vector<128x384xbf16>
    %cst = arith.constant dense<0.000000e+00> : vector<8x384xf32>
    %3 = tpu.matmul %1, %2, %cst {dimension_numbers = #tpu.dot_dimension_numbers<[1], [0], [0], [1], [0, 0, 1, 1], [], []>} : vector<8x128xbf16>, vector<128x384xbf16>, vector<8x384xf32> -> vector<8x384xf32>
    %4 = arith.truncf %3 : vector<8x384xf32> to vector<8x384xbf16>
    %c0_3 = arith.constant 0 : index
    %c0_4 = arith.constant 0 : index
    %5 = vector.load %arg3[%c0_3, %c0_4] : memref<8x384xbf16, #tpu.memory_space<vmem>>, vector<8x384xbf16>
    tpu.vector_store %arg3[%c0_3, %c0_4], %4 {strides = array<i32>} : memref<8x384xbf16, #tpu.memory_space<vmem>>, vector<8x384xbf16>,
    return
  }
  func.func @transform_0(%arg0: i32) -> (i32, i32) {
    %c0_i32 = arith.constant 0 : i32
    %c0_i32_0 = arith.constant 0 : i32
    return %arg0, %c0_i32 : i32, i32
  }
  func.func @transform_1(%arg0: i32) -> (i32, i32) {
    %c0_i32 = arith.constant 0 : i32
    %c0_i32_0 = arith.constant 0 : i32
    %c0_i32_1 = arith.constant 0 : i32
    return %c0_i32, %c0_i32_0 : i32, i32
  }
  func.func @transform_2(%arg0: i32) -> (i32, i32) {
    %c0_i32 = arith.constant 0 : i32
    %c0_i32_0 = arith.constant 0 : i32
    return %arg0, %c0_i32 : i32, i32
  }
}

module attributes {stable_mosaic.version = 11 : i64} {
  func.func @_edge_attn_kernel(%arg0: i32, %arg1: memref<1x1x16xi32, #tpu.memory_space<vmem>>, %arg2: memref<16x1xi32, #tpu.memory_space<vmem>>, %arg3: memref<16x1xi32, #tpu.memory_space<vmem>>, %arg4: memref<8x384xbf16, #tpu.memory_space<vmem>>, %arg5: memref<128x4xf32, #tpu.memory_space<vmem>>, %arg6: memref<4x128xf32, #tpu.memory_space<vmem>>, %arg7: memref<8x128xf32, #tpu.memory_space<vmem>>, %arg8: memref<8x4xf32, #tpu.memory_space<vmem>>) attributes {dimension_semantics = [#tpu.dimension_semantics<arbitrary>], iteration_bounds = array<i64: 2>, scalar_prefetch = 0 : i64, scratch_operands = 1 : i64, tpu.core_type = #tpu.core_type<tc>, window_params = [{transform_indices = @transform_0, window_bounds = array<i64: 1, 1, 16>}, {transform_indices = @transform_1, window_bounds = array<i64: 16, 1>}, {transform_indices = @transform_2, window_bounds = array<i64: 16, 1>}, {pipeline_mode = #tpu.pipeline_mode<synchronous>, transform_indices = @transform_3, window_bounds = array<i64: 8, 384>}, {pipeline_mode = #tpu.pipeline_mode<synchronous>, transform_indices = @transform_4, window_bounds = array<i64: 128, 4>}, {pipeline_mode = #tpu.pipeline_mode<synchronous>, transform_indices = @transform_5, window_bounds = array<i64: 4, 128>}, {pipeline_mode = #tpu.pipeline_mode<synchronous>, transform_indices = @transform_6, window_bounds = array<i64: 8, 128>}]} {
    %c0_i32 = arith.constant 0 : i32
    %0 = arith.cmpi eq, %arg0, %c0_i32 : i32
    %1 = arith.extui %0 : i1 to i32
    %c0_i32_0 = arith.constant 0 : i32
    %2 = arith.cmpi ne, %1, %c0_i32_0 : i32
    scf.if %2 {
      %cst_28 = arith.constant 0.000000e+00 : f32
      %47 = vector.broadcast %cst_28 : f32 to vector<8x128xf32>
      %c0_29 = arith.constant 0 : index
      %c0_30 = arith.constant 0 : index
      %48 = vector.load %arg7[%c0_29, %c0_30] : memref<8x128xf32, #tpu.memory_space<vmem>>, vector<8x128xf32>
      tpu.vector_store %arg7[%c0_29, %c0_30], %47 {strides = array<i32>} : memref<8x128xf32, #tpu.memory_space<vmem>>, vector<8x128xf32>,
      %cst_31 = arith.constant 0.000000e+00 : f32
      %49 = vector.broadcast %cst_31 : f32 to vector<8x4xf32>
      %c0_32 = arith.constant 0 : index
      %c0_33 = arith.constant 0 : index
      %50 = vector.load %arg8[%c0_32, %c0_33] : memref<8x4xf32, #tpu.memory_space<vmem>>, vector<8x4xf32>
      tpu.vector_store %arg8[%c0_32, %c0_33], %49 {strides = array<i32>} : memref<8x4xf32, #tpu.memory_space<vmem>>, vector<8x4xf32>,
    } else {
    }
    %c0 = arith.constant 0 : index
    %c0_1 = arith.constant 0 : index
    %3 = vector.load %arg2[%c0, %c0_1] : memref<16x1xi32, #tpu.memory_space<vmem>>, vector<16x1xi32>
    %c0_2 = arith.constant 0 : index
    %c0_3 = arith.constant 0 : index
    %4 = vector.load %arg3[%c0_2, %c0_3] : memref<16x1xi32, #tpu.memory_space<vmem>>, vector<16x1xi32>
    %c0_4 = arith.constant 0 : index
    %c0_5 = arith.constant 0 : index
    %c0_6 = arith.constant 0 : index
    %5 = vector.load %arg1[%c0_4, %c0_5, %c0_6] : memref<1x1x16xi32, #tpu.memory_space<vmem>>, vector<1x1x16xi32>
    %6 = vector.shape_cast %5 : vector<1x1x16xi32> to vector<1x16xi32>
    %7 = tpu.iota {dimensions = array<i32: 1>} : vector<16x8xi32>
    %8 = vector.broadcast %3 : vector<16x1xi32> to vector<16x8xi32>
    %9 = arith.cmpi eq, %7, %8 : vector<16x8xi32>
    %10 = arith.extui %9 : vector<16x8xi1> to vector<16x8xi32>
    %11 = arith.sitofp %10 : vector<16x8xi32> to vector<16x8xf32>
    %12 = arith.truncf %11 : vector<16x8xf32> to vector<16x8xbf16>
    %13 = vector.broadcast %4 : vector<16x1xi32> to vector<16x8xi32>
    %14 = arith.cmpi eq, %7, %13 : vector<16x8xi32>
    %15 = arith.extui %14 : vector<16x8xi1> to vector<16x8xi32>
    %16 = arith.sitofp %15 : vector<16x8xi32> to vector<16x8xf32>
    %17 = arith.truncf %16 : vector<16x8xf32> to vector<16x8xbf16>
    %c0_7 = arith.constant 0 : index
    %c0_8 = arith.constant 0 : index
    %18 = vector.load %arg4[%c0_7, %c0_8] : memref<8x384xbf16, #tpu.memory_space<vmem>>, vector<8x128xbf16>
    %cst = arith.constant dense<0.000000e+00> : vector<16x128xf32>
    %19 = tpu.matmul %12, %18, %cst {dimension_numbers = #tpu.dot_dimension_numbers<[1], [0], [0], [1], [0, 0, 1, 1], [], []>} : vector<16x8xbf16>, vector<8x128xbf16>, vector<16x128xf32> -> vector<16x128xf32>
    %c0_9 = arith.constant 0 : index
    %c128 = arith.constant 128 : index
    %20 = vector.load %arg4[%c0_9, %c128] : memref<8x384xbf16, #tpu.memory_space<vmem>>, vector<8x256xbf16>
    %cst_10 = arith.constant dense<0.000000e+00> : vector<16x256xf32>
    %21 = tpu.matmul %17, %20, %cst_10 {dimension_numbers = #tpu.dot_dimension_numbers<[1], [0], [0], [1], [0, 0, 1, 1], [], []>} : vector<16x8xbf16>, vector<8x256xbf16>, vector<16x256xf32> -> vector<16x256xf32>
    %22 = vector.extract_strided_slice %21 {offsets = [0, 0], sizes = [16, 128], strides = [1, 1]} : vector<16x256xf32> to vector<16x128xf32>
    %23 = vector.extract_strided_slice %21 {offsets = [0, 128], sizes = [16, 128], strides = [1, 1]} : vector<16x256xf32> to vector<16x128xf32>
    %24 = arith.mulf %19, %22 : vector<16x128xf32>
    %c0_11 = arith.constant 0 : index
    %c0_12 = arith.constant 0 : index
    %25 = vector.load %arg5[%c0_11, %c0_12] : memref<128x4xf32, #tpu.memory_space<vmem>>, vector<128x4xf32>
    %cst_13 = arith.constant dense<0.000000e+00> : vector<16x4xf32>
    %26 = tpu.matmul %24, %25, %cst_13 {dimension_numbers = #tpu.dot_dimension_numbers<[1], [0], [0], [1], [0, 0, 1, 1], [], []>} : vector<16x128xf32>, vector<128x4xf32>, vector<16x4xf32> -> vector<16x4xf32>
    %27 = math.exp %26 : vector<16x4xf32>
    %c0_14 = arith.constant 0 : index
    %c0_15 = arith.constant 0 : index
    %28 = vector.load %arg6[%c0_14, %c0_15] : memref<4x128xf32, #tpu.memory_space<vmem>>, vector<4x128xf32>
    %cst_16 = arith.constant dense<0.000000e+00> : vector<16x128xf32>
    %29 = tpu.matmul %27, %28, %cst_16 {dimension_numbers = #tpu.dot_dimension_numbers<[1], [0], [0], [1], [0, 0, 1, 1], [], []>} : vector<16x4xf32>, vector<4x128xf32>, vector<16x128xf32> -> vector<16x128xf32>
    %30 = arith.mulf %29, %23 : vector<16x128xf32>
    %31 = tpu.iota {dimensions = array<i32: 0>} : vector<8x16xi32>
    %32 = vector.broadcast %6 : vector<1x16xi32> to vector<8x16xi32>
    %33 = arith.cmpi eq, %31, %32 : vector<8x16xi32>
    %34 = arith.extui %33 : vector<8x16xi1> to vector<8x16xi32>
    %35 = arith.sitofp %34 : vector<8x16xi32> to vector<8x16xf32>
    %c0_17 = arith.constant 0 : index
    %c0_18 = arith.constant 0 : index
    %36 = vector.load %arg7[%c0_17, %c0_18] : memref<8x128xf32, #tpu.memory_space<vmem>>, vector<8x128xf32>
    %cst_19 = arith.constant dense<0.000000e+00> : vector<8x128xf32>
    %37 = tpu.matmul %35, %30, %cst_19 {dimension_numbers = #tpu.dot_dimension_numbers<[1], [0], [0], [1], [0, 0, 1, 1], [], []>} : vector<8x16xf32>, vector<16x128xf32>, vector<8x128xf32> -> vector<8x128xf32>
    %38 = arith.addf %36, %37 : vector<8x128xf32>
    %c0_20 = arith.constant 0 : index
    %c0_21 = arith.constant 0 : index
    %39 = vector.load %arg7[%c0_20, %c0_21] : memref<8x128xf32, #tpu.memory_space<vmem>>, vector<8x128xf32>
    tpu.vector_store %arg7[%c0_20, %c0_21], %38 {strides = array<i32>} : memref<8x128xf32, #tpu.memory_space<vmem>>, vector<8x128xf32>,
    %c0_22 = arith.constant 0 : index
    %c0_23 = arith.constant 0 : index
    %40 = vector.load %arg8[%c0_22, %c0_23] : memref<8x4xf32, #tpu.memory_space<vmem>>, vector<8x4xf32>
    %cst_24 = arith.constant dense<0.000000e+00> : vector<8x4xf32>
    %41 = tpu.matmul %35, %27, %cst_24 {dimension_numbers = #tpu.dot_dimension_numbers<[1], [0], [0], [1], [0, 0, 1, 1], [], []>} : vector<8x16xf32>, vector<16x4xf32>, vector<8x4xf32> -> vector<8x4xf32>
    %42 = arith.addf %40, %41 : vector<8x4xf32>
    %c0_25 = arith.constant 0 : index
    %c0_26 = arith.constant 0 : index
    %43 = vector.load %arg8[%c0_25, %c0_26] : memref<8x4xf32, #tpu.memory_space<vmem>>, vector<8x4xf32>
    tpu.vector_store %arg8[%c0_25, %c0_26], %42 {strides = array<i32>} : memref<8x4xf32, #tpu.memory_space<vmem>>, vector<8x4xf32>,
    %c1_i32 = arith.constant 1 : i32
    %44 = arith.cmpi eq, %arg0, %c1_i32 : i32
    %45 = arith.extui %44 : i1 to i32
    %c0_i32_27 = arith.constant 0 : i32
    %46 = arith.cmpi ne, %45, %c0_i32_27 : i32
    scf.if %46 {
      %c0_28 = arith.constant 0 : index
      %c0_29 = arith.constant 0 : index
      %47 = vector.load %arg8[%c0_28, %c0_29] : memref<8x4xf32, #tpu.memory_space<vmem>>, vector<8x4xf32>
      %c0_30 = arith.constant 0 : index
      %c0_31 = arith.constant 0 : index
      %48 = vector.load %arg6[%c0_30, %c0_31] : memref<4x128xf32, #tpu.memory_space<vmem>>, vector<4x128xf32>
      %cst_32 = arith.constant dense<0.000000e+00> : vector<8x128xf32>
      %49 = tpu.matmul %47, %48, %cst_32 {dimension_numbers = #tpu.dot_dimension_numbers<[1], [0], [0], [1], [0, 0, 1, 1], [], []>} : vector<8x4xf32>, vector<4x128xf32>, vector<8x128xf32> -> vector<8x128xf32>
      %cst_33 = arith.constant 0.000000e+00 : f32
      %50 = vector.broadcast %cst_33 : f32 to vector<8x128xf32>
      %51 = arith.cmpf ogt, %49, %50 : vector<8x128xf32>
      %cst_34 = arith.constant 1.000000e+00 : f32
      %52 = vector.broadcast %cst_34 : f32 to vector<8x128xf32>
      %53 = arith.divf %52, %49 : vector<8x128xf32>
      %cst_35 = arith.constant 0.000000e+00 : f32
      %54 = vector.broadcast %cst_35 : f32 to vector<8x128xf32>
      %55 = arith.select %51, %53, %54 : vector<8x128xi1>, vector<8x128xf32>
      %c0_36 = arith.constant 0 : index
      %c0_37 = arith.constant 0 : index
      %56 = vector.load %arg7[%c0_36, %c0_37] : memref<8x128xf32, #tpu.memory_space<vmem>>, vector<8x128xf32>
      %57 = arith.mulf %56, %55 : vector<8x128xf32>
      %c0_38 = arith.constant 0 : index
      %c0_39 = arith.constant 0 : index
      %58 = vector.load %arg7[%c0_38, %c0_39] : memref<8x128xf32, #tpu.memory_space<vmem>>, vector<8x128xf32>
      tpu.vector_store %arg7[%c0_38, %c0_39], %57 {strides = array<i32>} : memref<8x128xf32, #tpu.memory_space<vmem>>, vector<8x128xf32>,
    } else {
    }
    return
  }
  func.func @transform_0(%arg0: i32) -> (i32, i32, i32) {
    %c0_i32 = arith.constant 0 : i32
    %c0_i32_0 = arith.constant 0 : i32
    %c0_i32_1 = arith.constant 0 : i32
    return %arg0, %c0_i32, %c0_i32_0 : i32, i32, i32
  }
  func.func @transform_1(%arg0: i32) -> (i32, i32) {
    %c0_i32 = arith.constant 0 : i32
    %c0_i32_0 = arith.constant 0 : i32
    return %arg0, %c0_i32 : i32, i32
  }
  func.func @transform_2(%arg0: i32) -> (i32, i32) {
    %c0_i32 = arith.constant 0 : i32
    %c0_i32_0 = arith.constant 0 : i32
    return %arg0, %c0_i32 : i32, i32
  }
  func.func @transform_3(%arg0: i32) -> (i32, i32) {
    %c0_i32 = arith.constant 0 : i32
    %c0_i32_0 = arith.constant 0 : i32
    %c0_i32_1 = arith.constant 0 : i32
    return %c0_i32, %c0_i32_0 : i32, i32
  }
  func.func @transform_4(%arg0: i32) -> (i32, i32) {
    %c0_i32 = arith.constant 0 : i32
    %c0_i32_0 = arith.constant 0 : i32
    %c0_i32_1 = arith.constant 0 : i32
    return %c0_i32, %c0_i32_0 : i32, i32
  }
  func.func @transform_5(%arg0: i32) -> (i32, i32) {
    %c0_i32 = arith.constant 0 : i32
    %c0_i32_0 = arith.constant 0 : i32
    %c0_i32_1 = arith.constant 0 : i32
    return %c0_i32, %c0_i32_0 : i32, i32
  }
  func.func @transform_6(%arg0: i32) -> (i32, i32) {
    %c0_i32 = arith.constant 0 : i32
    %c0_i32_0 = arith.constant 0 : i32
    %c0_i32_1 = arith.constant 0 : i32
    return %c0_i32, %c0_i32_0 : i32, i32
  }
}

module attributes {stable_mosaic.version = 11 : i64} {
  func.func @_post_kernel(%arg0: i32, %arg1: memref<8x128xf32, #tpu.memory_space<vmem>>, %arg2: memref<8x128xf32, #tpu.memory_space<vmem>>, %arg3: memref<128x128xbf16, #tpu.memory_space<vmem>>, %arg4: memref<128x128xbf16, #tpu.memory_space<vmem>>, %arg5: memref<8x128xf32, #tpu.memory_space<vmem>>, %arg6: memref<8x128xf32, #tpu.memory_space<vmem>>) attributes {dimension_semantics = [#tpu.dimension_semantics<parallel>], iteration_bounds = array<i64: 1>, scalar_prefetch = 0 : i64, scratch_operands = 0 : i64, tpu.core_type = #tpu.core_type<tc>, window_params = [{transform_indices = @transform_0, window_bounds = array<i64: 8, 128>}, {transform_indices = @transform_1, window_bounds = array<i64: 8, 128>}, {pipeline_mode = #tpu.pipeline_mode<synchronous>, transform_indices = @transform_2, window_bounds = array<i64: 128, 128>}, {pipeline_mode = #tpu.pipeline_mode<synchronous>, transform_indices = @transform_3, window_bounds = array<i64: 128, 128>}, {pipeline_mode = #tpu.pipeline_mode<synchronous>, transform_indices = @transform_4, window_bounds = array<i64: 8, 128>}, {transform_indices = @transform_5, window_bounds = array<i64: 8, 128>}]} {
    %c0 = arith.constant 0 : index
    %c0_0 = arith.constant 0 : index
    %0 = vector.load %arg5[%c0, %c0_0] : memref<8x128xf32, #tpu.memory_space<vmem>>, vector<8x128xf32>
    %1 = vector.extract_strided_slice %0 {offsets = [0, 0], sizes = [1, 128], strides = [1, 1]} : vector<8x128xf32> to vector<1x128xf32>
    %2 = vector.extract_strided_slice %0 {offsets = [1, 0], sizes = [1, 128], strides = [1, 1]} : vector<8x128xf32> to vector<1x128xf32>
    %3 = vector.extract_strided_slice %0 {offsets = [2, 0], sizes = [1, 128], strides = [1, 1]} : vector<8x128xf32> to vector<1x128xf32>
    %4 = vector.extract_strided_slice %0 {offsets = [3, 0], sizes = [1, 128], strides = [1, 1]} : vector<8x128xf32> to vector<1x128xf32>
    %5 = vector.extract_strided_slice %0 {offsets = [4, 0], sizes = [1, 128], strides = [1, 1]} : vector<8x128xf32> to vector<1x128xf32>
    %6 = vector.extract_strided_slice %0 {offsets = [5, 0], sizes = [1, 128], strides = [1, 1]} : vector<8x128xf32> to vector<1x128xf32>
    %c0_1 = arith.constant 0 : index
    %c0_2 = arith.constant 0 : index
    %7 = vector.load %arg1[%c0_1, %c0_2] : memref<8x128xf32, #tpu.memory_space<vmem>>, vector<8x128xf32>
    %c0_3 = arith.constant 0 : index
    %c0_4 = arith.constant 0 : index
    %8 = vector.load %arg2[%c0_3, %c0_4] : memref<8x128xf32, #tpu.memory_space<vmem>>, vector<8x128xf32>
    %9 = arith.addf %7, %8 : vector<8x128xf32>
    %cst = arith.constant dense<0.000000e+00> : vector<8xf32>
    %10 = vector.multi_reduction <add>, %9, %cst [1] : vector<8x128xf32> to vector<8xf32>
    %11 = vector.shape_cast %10 : vector<8xf32> to vector<8x1xf32>
    %cst_5 = arith.constant 1.280000e+02 : f32
    %12 = vector.broadcast %cst_5 : f32 to vector<8x1xf32>
    %13 = arith.divf %11, %12 : vector<8x1xf32>
    %14 = vector.broadcast %13 : vector<8x1xf32> to vector<8x128xf32>
    %15 = arith.subf %9, %14 : vector<8x128xf32>
    %16 = arith.mulf %15, %15 : vector<8x128xf32>
    %cst_6 = arith.constant dense<0.000000e+00> : vector<8xf32>
    %17 = vector.multi_reduction <add>, %16, %cst_6 [1] : vector<8x128xf32> to vector<8xf32>
    %18 = vector.shape_cast %17 : vector<8xf32> to vector<8x1xf32>
    %cst_7 = arith.constant 1.280000e+02 : f32
    %19 = vector.broadcast %cst_7 : f32 to vector<8x1xf32>
    %20 = arith.divf %18, %19 : vector<8x1xf32>
    %cst_8 = arith.constant 9.99999974E-6 : f32
    %21 = vector.broadcast %cst_8 : f32 to vector<8x1xf32>
    %22 = arith.addf %20, %21 : vector<8x1xf32>
    %23 = math.rsqrt %22 : vector<8x1xf32>
    %24 = vector.broadcast %23 : vector<8x1xf32> to vector<8x128xf32>
    %25 = arith.mulf %15, %24 : vector<8x128xf32>
    %26 = vector.broadcast %1 : vector<1x128xf32> to vector<8x128xf32>
    %27 = arith.mulf %25, %26 : vector<8x128xf32>
    %28 = vector.broadcast %2 : vector<1x128xf32> to vector<8x128xf32>
    %29 = arith.addf %27, %28 : vector<8x128xf32>
    %30 = arith.truncf %29 : vector<8x128xf32> to vector<8x128xbf16>
    %c0_9 = arith.constant 0 : index
    %c0_10 = arith.constant 0 : index
    %31 = vector.load %arg3[%c0_9, %c0_10] : memref<128x128xbf16, #tpu.memory_space<vmem>>, vector<128x128xbf16>
    %cst_11 = arith.constant dense<0.000000e+00> : vector<8x128xf32>
    %32 = tpu.matmul %30, %31, %cst_11 {dimension_numbers = #tpu.dot_dimension_numbers<[1], [0], [0], [1], [0, 0, 1, 1], [], []>} : vector<8x128xbf16>, vector<128x128xbf16>, vector<8x128xf32> -> vector<8x128xf32>
    %33 = vector.broadcast %3 : vector<1x128xf32> to vector<8x128xf32>
    %34 = arith.addf %32, %33 : vector<8x128xf32>
    %cst_12 = arith.constant 0.000000e+00 : f32
    %35 = vector.broadcast %cst_12 : f32 to vector<8x128xf32>
    %36 = arith.maximumf %34, %35 : vector<8x128xf32>
    %37 = arith.truncf %36 : vector<8x128xf32> to vector<8x128xbf16>
    %c0_13 = arith.constant 0 : index
    %c0_14 = arith.constant 0 : index
    %38 = vector.load %arg4[%c0_13, %c0_14] : memref<128x128xbf16, #tpu.memory_space<vmem>>, vector<128x128xbf16>
    %cst_15 = arith.constant dense<0.000000e+00> : vector<8x128xf32>
    %39 = tpu.matmul %37, %38, %cst_15 {dimension_numbers = #tpu.dot_dimension_numbers<[1], [0], [0], [1], [0, 0, 1, 1], [], []>} : vector<8x128xbf16>, vector<128x128xbf16>, vector<8x128xf32> -> vector<8x128xf32>
    %40 = vector.broadcast %4 : vector<1x128xf32> to vector<8x128xf32>
    %41 = arith.addf %39, %40 : vector<8x128xf32>
    %42 = arith.addf %29, %41 : vector<8x128xf32>
    %cst_16 = arith.constant dense<0.000000e+00> : vector<8xf32>
    %43 = vector.multi_reduction <add>, %42, %cst_16 [1] : vector<8x128xf32> to vector<8xf32>
    %44 = vector.shape_cast %43 : vector<8xf32> to vector<8x1xf32>
    %cst_17 = arith.constant 1.280000e+02 : f32
    %45 = vector.broadcast %cst_17 : f32 to vector<8x1xf32>
    %46 = arith.divf %44, %45 : vector<8x1xf32>
    %47 = vector.broadcast %46 : vector<8x1xf32> to vector<8x128xf32>
    %48 = arith.subf %42, %47 : vector<8x128xf32>
    %49 = arith.mulf %48, %48 : vector<8x128xf32>
    %cst_18 = arith.constant dense<0.000000e+00> : vector<8xf32>
    %50 = vector.multi_reduction <add>, %49, %cst_18 [1] : vector<8x128xf32> to vector<8xf32>
    %51 = vector.shape_cast %50 : vector<8xf32> to vector<8x1xf32>
    %cst_19 = arith.constant 1.280000e+02 : f32
    %52 = vector.broadcast %cst_19 : f32 to vector<8x1xf32>
    %53 = arith.divf %51, %52 : vector<8x1xf32>
    %cst_20 = arith.constant 9.99999974E-6 : f32
    %54 = vector.broadcast %cst_20 : f32 to vector<8x1xf32>
    %55 = arith.addf %53, %54 : vector<8x1xf32>
    %56 = math.rsqrt %55 : vector<8x1xf32>
    %57 = vector.broadcast %56 : vector<8x1xf32> to vector<8x128xf32>
    %58 = arith.mulf %48, %57 : vector<8x128xf32>
    %59 = vector.broadcast %5 : vector<1x128xf32> to vector<8x128xf32>
    %60 = arith.mulf %58, %59 : vector<8x128xf32>
    %61 = vector.broadcast %6 : vector<1x128xf32> to vector<8x128xf32>
    %62 = arith.addf %60, %61 : vector<8x128xf32>
    %c0_21 = arith.constant 0 : index
    %c0_22 = arith.constant 0 : index
    %63 = vector.load %arg6[%c0_21, %c0_22] : memref<8x128xf32, #tpu.memory_space<vmem>>, vector<8x128xf32>
    tpu.vector_store %arg6[%c0_21, %c0_22], %62 {strides = array<i32>} : memref<8x128xf32, #tpu.memory_space<vmem>>, vector<8x128xf32>,
    return
  }
  func.func @transform_0(%arg0: i32) -> (i32, i32) {
    %c0_i32 = arith.constant 0 : i32
    %c0_i32_0 = arith.constant 0 : i32
    return %arg0, %c0_i32 : i32, i32
  }
  func.func @transform_1(%arg0: i32) -> (i32, i32) {
    %c0_i32 = arith.constant 0 : i32
    %c0_i32_0 = arith.constant 0 : i32
    return %arg0, %c0_i32 : i32, i32
  }
  func.func @transform_2(%arg0: i32) -> (i32, i32) {
    %c0_i32 = arith.constant 0 : i32
    %c0_i32_0 = arith.constant 0 : i32
    %c0_i32_1 = arith.constant 0 : i32
    return %c0_i32, %c0_i32_0 : i32, i32
  }
  func.func @transform_3(%arg0: i32) -> (i32, i32) {
    %c0_i32 = arith.constant 0 : i32
    %c0_i32_0 = arith.constant 0 : i32
    %c0_i32_1 = arith.constant 0 : i32
    return %c0_i32, %c0_i32_0 : i32, i32
  }
  func.func @transform_4(%arg0: i32) -> (i32, i32) {
    %c0_i32 = arith.constant 0 : i32
    %c0_i32_0 = arith.constant 0 : i32
    %c0_i32_1 = arith.constant 0 : i32
    return %c0_i32, %c0_i32_0 : i32, i32
  }
  func.func @transform_5(%arg0: i32) -> (i32, i32) {
    %c0_i32 = arith.constant 0 : i32
    %c0_i32_0 = arith.constant 0 : i32
    return %arg0, %c0_i32 : i32, i32
  }
}

</mosaic_0001>

<llo_original>
// kernel: transformer_block_sparse.3
$region0: #{transformer_block_sparse.3}
  #allocation0 [shape = 'u32[]', space=smem, size = 0x4, offset = 0x4, fixed_abs, tag = 'smem constant byte address 0x4 - core index']
  #allocation1 [shape = 'u32[72,128]{1,0:T(1,128)}', space=vmem, size = 0x9000, scoped, tag = 'internal scratch']
  %s0 = inlined_call_operand.vmem [shape: f32[8,128], index: 0, kind: input, shape index: {}]
  %s1 = inlined_call_operand.vmem [shape: bf16[128,384], index: 1, kind: input, shape index: {}]
  %s2 = inlined_call_operand.vmem [shape: bf16[8,384], index: 2, kind: output, shape index: {}]
  %s3 = sld [smem:[#allocation0]]
  $region18: #{transformer_block_sparse.3} parent=0
    _
  %s5 = ssub.s32 1, %s3
  %s6 = scalar_select 0, %s5, %s3
  // Predicated region
  $region2: #{transformer_block_sparse.3} parent=0 // pred_check
    _
  $region3: #{transformer_block_sparse.3} parent=0 // pred_check_branch
    %8 = sbr.rel (0) target = $region5
  $region4: #{transformer_block_sparse.3} parent=0 // pred_region
    _
  $region5: #{transformer_block_sparse.3} parent=0 // pred_fallthru
    _
  // Predicated region
  $region6: #{transformer_block_sparse.3} parent=0 // pred_check
    _
  $region7: #{transformer_block_sparse.3} parent=0 // pred_check_branch
    %10 = sbr.rel (0) target = $region9
  $region8: #{transformer_block_sparse.3} parent=0 // pred_region
    _
  $region9: #{transformer_block_sparse.3} parent=0 // pred_fallthru
    _
  %v11 = vld [vmem:[%s0] sm:$0xff]
  %v12 = vpack.c.bf16 %v11, %v11
  %v13 = vld [vmem:[%s1] sm:$0xff]
  %v14 = vld [vmem:[%s1 + $0x8] sm:$0xf]
  %v15 = vld [vmem:[%s1 + $0xc] sm:$0xff]
  %v16 = vld [vmem:[%s1 + $0x14] sm:$0xf]
  %v17 = vld [vmem:[%s1 + $0x18] sm:$0xff]
  %v18 = vld [vmem:[%s1 + $0x20] sm:$0xf]
  %v19 = vld [vmem:[%s1 + $0x24] sm:$0xff]
  %v20 = vld [vmem:[%s1 + $0x2c] sm:$0xf]
  %v21 = vld [vmem:[%s1 + $0x30] sm:$0xff]
  %v22 = vld [vmem:[%s1 + $0x38] sm:$0xf]
  %v23 = vld [vmem:[%s1 + $0x3c] sm:$0xff]
  %v24 = vld [vmem:[%s1 + $0x44] sm:$0xf]
  %v25 = vld [vmem:[%s1 + $0x48] sm:$0xff]
  %v26 = vld [vmem:[%s1 + $0x50] sm:$0xf]
  %v27 = vld [vmem:[%s1 + $0x54] sm:$0xff]
  %v28 = vld [vmem:[%s1 + $0x5c] sm:$0xf]
  %v29 = vld [vmem:[%s1 + $0x60] sm:$0xff]
  %v30 = vld [vmem:[%s1 + $0x68] sm:$0xf]
  %v31 = vld [vmem:[%s1 + $0x6c] sm:$0xff]
  %v32 = vld [vmem:[%s1 + $0x74] sm:$0xf]
  %v33 = vld [vmem:[%s1 + $0x78] sm:$0xff]
  %v34 = vld [vmem:[%s1 + $0x80] sm:$0xf]
  %v35 = vld [vmem:[%s1 + $0x84] sm:$0xff]
  %v36 = vld [vmem:[%s1 + $0x8c] sm:$0xf]
  %v37 = vld [vmem:[%s1 + $0x90] sm:$0xff]
  %v38 = vld [vmem:[%s1 + $0x98] sm:$0xf]
  %v39 = vld [vmem:[%s1 + $0x9c] sm:$0xff]
  %v40 = vld [vmem:[%s1 + $0xa4] sm:$0xf]
  %v41 = vld [vmem:[%s1 + $0xa8] sm:$0xff]
  %v42 = vld [vmem:[%s1 + $0xb0] sm:$0xf]
  %v43 = vld [vmem:[%s1 + $0xb4] sm:$0xff]
  %v44 = vld [vmem:[%s1 + $0xbc] sm:$0xf]
  %v77 = vunpack.c.l.b16 %v13
  %v78 = vunpack.c.h.b16 %v13
  %v79 = vunpack.c.l.b16 %v14
  %v80 = vunpack.c.l.b16 %v15
  %v81 = vunpack.c.h.b16 %v15
  %v82 = vunpack.c.l.b16 %v16
  %v83 = vunpack.c.l.b16 %v17
  %v84 = vunpack.c.h.b16 %v17
  %v85 = vunpack.c.l.b16 %v18
  %v86 = vunpack.c.l.b16 %v19
  %v87 = vunpack.c.h.b16 %v19
  %v88 = vunpack.c.l.b16 %v20
  %v89 = vunpack.c.l.b16 %v21
  %v90 = vunpack.c.h.b16 %v21
  %v91 = vunpack.c.l.b16 %v22
  %v92 = vunpack.c.l.b16 %v23
  %v93 = vunpack.c.h.b16 %v23
  %v94 = vunpack.c.l.b16 %v24
  %v95 = vunpack.c.l.b16 %v25
  %v96 = vunpack.c.h.b16 %v25
  %v97 = vunpack.c.l.b16 %v26
  %v98 = vunpack.c.l.b16 %v27
  %v99 = vunpack.c.h.b16 %v27
  %v100 = vunpack.c.l.b16 %v28
  %v101 = vunpack.c.l.b16 %v29
  %v102 = vunpack.c.h.b16 %v29
  %v103 = vunpack.c.l.b16 %v30
  %v104 = vunpack.c.l.b16 %v31
  %v105 = vunpack.c.h.b16 %v31
  %v106 = vunpack.c.l.b16 %v32
  %v107 = vunpack.c.l.b16 %v33
  %v108 = vunpack.c.h.b16 %v33
  %v109 = vunpack.c.l.b16 %v34
  %v110 = vunpack.c.l.b16 %v35
  %v111 = vunpack.c.h.b16 %v35
  %v112 = vunpack.c.l.b16 %v36
  %v113 = vunpack.c.l.b16 %v37
  %v114 = vunpack.c.h.b16 %v37
  %v115 = vunpack.c.l.b16 %v38
  %v116 = vunpack.c.l.b16 %v39
  %v117 = vunpack.c.h.b16 %v39
  %v118 = vunpack.c.l.b16 %v40
  %v119 = vunpack.c.l.b16 %v41
  %v120 = vunpack.c.h.b16 %v41
  %v121 = vunpack.c.l.b16 %v42
  %v122 = vunpack.c.l.b16 %v43
  %v123 = vunpack.c.h.b16 %v43
  %v124 = vunpack.c.l.b16 %v44
  %v125 = vpack.c.b16 %v80, %v77
  %v126 = vpack.c.b16 %v81, %v78
  %v127 = vpack.c.b16 %v82, %v79
  %v128 = vpack.c.b16 %v86, %v83
  %v129 = vpack.c.b16 %v87, %v84
  %v130 = vpack.c.b16 %v88, %v85
  %v131 = vpack.c.b16 %v92, %v89
  %v132 = vpack.c.b16 %v93, %v90
  %v133 = vpack.c.b16 %v94, %v91
  %v134 = vpack.c.b16 %v98, %v95
  %v135 = vpack.c.b16 %v99, %v96
  %v136 = vpack.c.b16 %v100, %v97
  %v137 = vpack.c.b16 %v104, %v101
  %v138 = vpack.c.b16 %v105, %v102
  %v139 = vpack.c.b16 %v106, %v103
  %v140 = vpack.c.b16 %v110, %v107
  %v141 = vpack.c.b16 %v111, %v108
  %v142 = vpack.c.b16 %v112, %v109
  %v143 = vpack.c.b16 %v116, %v113
  %v144 = vpack.c.b16 %v117, %v114
  %v145 = vpack.c.b16 %v118, %v115
  %v146 = vpack.c.b16 %v122, %v119
  %v147 = vpack.c.b16 %v123, %v120
  %v148 = vpack.c.b16 %v124, %v121
  %173 = vmatpush.bf16.msra.mxu0 %v146
  %174 = vmatpush.bf16.msra.mxu0 %v143
  %175 = vmatpush.bf16.msra.mxu0 %v140
  %176 = vmatpush.bf16.msra.mxu0 %v137
  %177 = vmatpush.bf16.msra.mxu0 %v134
  %178 = vmatpush.bf16.msra.mxu0 %v131
  %179 = vmatpush.bf16.msra.mxu0 %v128
  %180 = vmatpush.bf16.msra.mxu0 %v125
  %181 = vmatmul.bf16.gmra.mxu0 %v12
  %v182 = vpop.f32.mrf.mxu0
  %v183 = vadd.f32 0.0, %v182
  %v184 = vpop.f32.mrf.mxu0
  %185 = vdwg.mxu0
  %186 = vmatpush.bf16.msra.mxu0 %v147
  %187 = vmatpush.bf16.msra.mxu0 %v144
  %188 = vmatpush.bf16.msra.mxu0 %v141
  %189 = vmatpush.bf16.msra.mxu0 %v138
  %190 = vmatpush.bf16.msra.mxu0 %v135
  %191 = vmatpush.bf16.msra.mxu0 %v132
  %192 = vmatpush.bf16.msra.mxu0 %v129
  %193 = vmatpush.bf16.msra.mxu0 %v126
  %194 = vmatmul.bf16.gmra.mxu0 %v12
  %v195 = vpop.f32.mrf.mxu0
  %v196 = vadd.f32 0.0, %v195
  %v197 = vpop.f32.mrf.mxu0
  %198 = vdwg.mxu0
  %199 = vmatpush.bf16.msra.mxu0 %v148
  %200 = vmatpush.bf16.msra.mxu0 %v145
  %201 = vmatpush.bf16.msra.mxu0 %v142
  %202 = vmatpush.bf16.msra.mxu0 %v139
  %203 = vmatpush.bf16.msra.mxu0 %v136
  %204 = vmatpush.bf16.msra.mxu0 %v133
  %205 = vmatpush.bf16.msra.mxu0 %v130
  %206 = vmatpush.bf16.msra.mxu0 %v127
  %207 = vmatmul.bf16.gmra.mxu0 %v12
  %v208 = vpop.f32.mrf.mxu0
  %v209 = vadd.f32 0.0, %v208
  %v210 = vpop.f32.mrf.mxu0
  %211 = vdwg.mxu0
  %v212 = vpack.c.bf16 %v196, %v183
  %v213 = vpack.c.bf16 %v209, %v209
  %214 = vst [vmem:[%s2] sm:$0xff] %v212
  %215 = vst [vmem:[%s2 + $0x8] sm:$0xf] %v213
  // Predicated region
  $region10: #{transformer_block_sparse.3} parent=0 // pred_check
    _
  $region11: #{transformer_block_sparse.3} parent=0 // pred_check_branch
    %217 = sbr.rel (0) target = $region13
  $region12: #{transformer_block_sparse.3} parent=0 // pred_region
    _
  $region13: #{transformer_block_sparse.3} parent=0 // pred_fallthru
    _
  // Predicated region
  $region14: #{transformer_block_sparse.3} parent=0 // pred_check
    _
  $region15: #{transformer_block_sparse.3} parent=0 // pred_check_branch
    %219 = sbr.rel (0) target = $region17
  $region16: #{transformer_block_sparse.3} parent=0 // pred_region
    _
  $region17: #{transformer_block_sparse.3} parent=0 // pred_fallthru
    _

// kernel: transformer_block_sparse.4
$region0: #{transformer_block_sparse.4}
  #allocation0 [shape = 'u32[]', space=smem, size = 0x4, offset = 0x4, fixed_abs, tag = 'smem constant byte address 0x4 - core index']
  #allocation1 [shape = 'u32[72,128]{1,0:T(1,128)}', space=vmem, size = 0x9000, scoped, tag = 'internal scratch']
  #allocation2 [shape = 'f32[8,4]{1,0:T(8,128)}', space=vmem, size = 0x1000, scoped, tag = 'scratch operand']
  %s0 = inlined_call_operand.vmem [shape: s32[2,1,16], index: 0, kind: input, shape index: {}]
  %s1 = inlined_call_operand.vmem [shape: s32[32,1], index: 1, kind: input, shape index: {}]
  %s2 = inlined_call_operand.vmem [shape: s32[32,1], index: 2, kind: input, shape index: {}]
  %s3 = inlined_call_operand.vmem [shape: bf16[8,384], index: 3, kind: input, shape index: {}]
  %s4 = inlined_call_operand.vmem [shape: f32[128,4], index: 4, kind: input, shape index: {}]
  %s5 = inlined_call_operand.vmem [shape: f32[4,128], index: 5, kind: input, shape index: {}]
  %s6 = inlined_call_operand.vmem [shape: f32[8,128], index: 6, kind: output, shape index: {}]
  %s7 = sld [smem:[#allocation0]]
  $region65: #{transformer_block_sparse.4} parent=0
    _
  %s9 = ssub.s32 1, %s7
  %s10 = scalar_select 0, %s9, %s7
  loop: start=0, step=1, limit=4
  $region2: #{transformer_block_sparse.4} parent=0 // loop_pre_header
    _
  $region3: #{transformer_block_sparse.4} parent=0 // loop_header
    %s12 = sphi 0, %s16
    %p13 = scmp.ge.s32.totalorder %s12, 4
    %s22 = sphi 0, %s24
    %s25 = sphi 0, %s22
    %s26 = sphi 0, %s25
    %s42 = sphi 0, %s26
    %s48 = sphi 0, %s50
    %s51 = sphi 0, %s48
    %s52 = sphi 0, %s51
    %s68 = sphi 0, %s52
    %s74 = sphi 0, %s76
    %s77 = sphi 0, %s74
    %s78 = sphi 0, %s77
    %s94 = sphi 0, %s78
    %s98 = sphi 0, %s98
    %s100 = sphi 0, %s98
    %s101 = sphi 0, %s100
    %s115 = sphi 0, %s101
    %s119 = sphi 0, %s119
    %s121 = sphi 0, %s119
    %s122 = sphi 0, %s121
    %s136 = sphi 0, %s122
    %s140 = sphi 0, %s140
    %s142 = sphi 0, %s140
    %s143 = sphi 0, %s142
    %s157 = sphi 0, %s143
    %s161 = sphi 0, %s161
    %s163 = sphi 0, %s161
    %s164 = sphi 0, %s163
    %s178 = sphi 0, %s164
  $region4: #{transformer_block_sparse.4} parent=0 // loop_header_branch
    %15 = sbr.rel (%p13) target = $region8
  $region5: #{transformer_block_sparse.4} parent=0 // loop_body
    %s17 = ssub.s32 %s12, 1
    %s18 = ssub.s32 %s12, 2
    %s19 = sadd.s32 %s12, 1
    %s20 = ssub.s32 %s12, %s19
    %p21 = scmp.eq.s32.totalorder %s20, 0
    %s23 = sadd.s32 %s22, 1
    %s24 = scalar_select %p21, %s22, %s23
    %p27 = pneg %p21
    %p28 = scmp.eq.s32.totalorder %s12, 1
    %p29 = por %p27, %p28
    %p30 = scmp.ne.s32.totalorder %s22, %s25
    %p31 = scmp.eq.s32.totalorder %s12, 0
    %p32 = por %p30, %p31
    %p33 = scmp.ne.s32.totalorder %s22, %s25
    %p34 = scmp.eq.s32.totalorder %s17, 1
    %p35 = por %p33, %p34
    %p36 = scmp.ne.s32.totalorder %s25, %s26
    %p37 = scmp.eq.s32.totalorder %s17, 0
    %p38 = por %p36, %p37
    %p39 = scmp.ne.s32.totalorder %s25, %s26
    %p40 = scmp.eq.s32.totalorder %s18, 1
    %p41 = por %p39, %p40
    %p43 = scmp.ne.s32.totalorder %s26, %s42
    %p44 = scmp.eq.s32.totalorder %s18, 0
    %p45 = por %p43, %p44
    %s46 = ssub.s32 %s12, %s19
    %p47 = scmp.eq.s32.totalorder %s46, 0
    %s49 = sadd.s32 %s48, 1
    %s50 = scalar_select %p47, %s48, %s49
    %p53 = pneg %p47
    %p54 = scmp.eq.s32.totalorder %s12, 1
    %p55 = por %p53, %p54
    %p56 = scmp.ne.s32.totalorder %s48, %s51
    %p57 = scmp.eq.s32.totalorder %s12, 0
    %p58 = por %p56, %p57
    %p59 = scmp.ne.s32.totalorder %s48, %s51
    %p60 = scmp.eq.s32.totalorder %s17, 1
    %p61 = por %p59, %p60
    %p62 = scmp.ne.s32.totalorder %s51, %s52
    %p63 = scmp.eq.s32.totalorder %s17, 0
    %p64 = por %p62, %p63
    %p65 = scmp.ne.s32.totalorder %s51, %s52
    %p66 = scmp.eq.s32.totalorder %s18, 1
    %p67 = por %p65, %p66
    %p69 = scmp.ne.s32.totalorder %s52, %s68
    %p70 = scmp.eq.s32.totalorder %s18, 0
    %p71 = por %p69, %p70
    %s72 = ssub.s32 %s12, %s19
    %p73 = scmp.eq.s32.totalorder %s72, 0
    %s75 = sadd.s32 %s74, 1
    %s76 = scalar_select %p73, %s74, %s75
    %p79 = pneg %p73
    %p80 = scmp.eq.s32.totalorder %s12, 1
    %p81 = por %p79, %p80
    %p82 = scmp.ne.s32.totalorder %s74, %s77
    %p83 = scmp.eq.s32.totalorder %s12, 0
    %p84 = por %p82, %p83
    %p85 = scmp.ne.s32.totalorder %s74, %s77
    %p86 = scmp.eq.s32.totalorder %s17, 1
    %p87 = por %p85, %p86
    %p88 = scmp.ne.s32.totalorder %s77, %s78
    %p89 = scmp.eq.s32.totalorder %s17, 0
    %p90 = por %p88, %p89
    %p91 = scmp.ne.s32.totalorder %s77, %s78
    %p92 = scmp.eq.s32.totalorder %s18, 1
    %p93 = por %p91, %p92
    %p95 = scmp.ne.s32.totalorder %s78, %s94
    %p96 = scmp.eq.s32.totalorder %s18, 0
    %p97 = por %p95, %p96
    %s99 = sadd.s32 %s98, 1
    %p102 = scmp.eq.s32.totalorder %s12, 1
    %p103 = scmp.ne.s32.totalorder %s98, %s100
    %p104 = scmp.eq.s32.totalorder %s12, 0
    %p105 = por %p103, %p104
    %p106 = scmp.ne.s32.totalorder %s98, %s100
    %p107 = scmp.eq.s32.totalorder %s17, 1
    %p108 = por %p106, %p107
    %p109 = scmp.ne.s32.totalorder %s100, %s101
    %p110 = scmp.eq.s32.totalorder %s17, 0
    %p111 = por %p109, %p110
    %p112 = scmp.ne.s32.totalorder %s100, %s101
    %p113 = scmp.eq.s32.totalorder %s18, 1
    %p114 = por %p112, %p113
    %p116 = scmp.ne.s32.totalorder %s101, %s115
    %p117 = scmp.eq.s32.totalorder %s18, 0
    %p118 = por %p116, %p117
    %s120 = sadd.s32 %s119, 1
    %p123 = scmp.eq.s32.totalorder %s12, 1
    %p124 = scmp.ne.s32.totalorder %s119, %s121
    %p125 = scmp.eq.s32.totalorder %s12, 0
    %p126 = por %p124, %p125
    %p127 = scmp.ne.s32.totalorder %s119, %s121
    %p128 = scmp.eq.s32.totalorder %s17, 1
    %p129 = por %p127, %p128
    %p130 = scmp.ne.s32.totalorder %s121, %s122
    %p131 = scmp.eq.s32.totalorder %s17, 0
    %p132 = por %p130, %p131
    %p133 = scmp.ne.s32.totalorder %s121, %s122
    %p134 = scmp.eq.s32.totalorder %s18, 1
    %p135 = por %p133, %p134
    %p137 = scmp.ne.s32.totalorder %s122, %s136
    %p138 = scmp.eq.s32.totalorder %s18, 0
    %p139 = por %p137, %p138
    %s141 = sadd.s32 %s140, 1
    %p144 = scmp.eq.s32.totalorder %s12, 1
    %p145 = scmp.ne.s32.totalorder %s140, %s142
    %p146 = scmp.eq.s32.totalorder %s12, 0
    %p147 = por %p145, %p146
    %p148 = scmp.ne.s32.totalorder %s140, %s142
    %p149 = scmp.eq.s32.totalorder %s17, 1
    %p150 = por %p148, %p149
    %p151 = scmp.ne.s32.totalorder %s142, %s143
    %p152 = scmp.eq.s32.totalorder %s17, 0
    %p153 = por %p151, %p152
    %p154 = scmp.ne.s32.totalorder %s142, %s143
    %p155 = scmp.eq.s32.totalorder %s18, 1
    %p156 = por %p154, %p155
    %p158 = scmp.ne.s32.totalorder %s143, %s157
    %p159 = scmp.eq.s32.totalorder %s18, 0
    %p160 = por %p158, %p159
    %s162 = sadd.s32 %s161, 1
    %p165 = scmp.eq.s32.totalorder %s12, 1
    %p166 = scmp.ne.s32.totalorder %s161, %s163
    %p167 = scmp.eq.s32.totalorder %s12, 0
    %p168 = por %p166, %p167
    %p169 = scmp.ne.s32.totalorder %s161, %s163
    %p170 = scmp.eq.s32.totalorder %s17, 1
    %p171 = por %p169, %p170
    %p172 = scmp.ne.s32.totalorder %s163, %s164
    %p173 = scmp.eq.s32.totalorder %s17, 0
    %p174 = por %p172, %p173
    %p175 = scmp.ne.s32.totalorder %s163, %s164
    %p176 = scmp.eq.s32.totalorder %s18, 1
    %p177 = por %p175, %p176
    %p179 = scmp.ne.s32.totalorder %s164, %s178
    %p180 = scmp.eq.s32.totalorder %s18, 0
    %p181 = por %p179, %p180
    %p182 = scmp.le.s32.totalorder 1, %s12
    %p183 = scmp.lt.s32.totalorder %s12, 3
    %p184 = pnand %p182, %p183
    %p185 = pneg %p184
    // Predicated region
    $region9: #{transformer_block_sparse.4} parent=5 // pred_check
      _
    $region10: #{transformer_block_sparse.4} parent=5 // pred_check_branch
      %187 = sbr.rel (%p184) target = $region12
    $region11: #{transformer_block_sparse.4} parent=5 // pred_region
      %s188 = ssub.s32 %s12, 1
      // Predicated region
      $region13: #{transformer_block_sparse.4} parent=11 // pred_check
        %p189 = pneg %p111
      $region14: #{transformer_block_sparse.4} parent=11 // pred_check_branch
        %191 = sbr.rel (%p189) target = $region16
      $region15: #{transformer_block_sparse.4} parent=11 // pred_region
        _
      $region16: #{transformer_block_sparse.4} parent=11 // pred_fallthru
        _
      // Predicated region
      $region17: #{transformer_block_sparse.4} parent=11 // pred_check
        %p192 = pneg %p132
      $region18: #{transformer_block_sparse.4} parent=11 // pred_check_branch
        %194 = sbr.rel (%p192) target = $region20
      $region19: #{transformer_block_sparse.4} parent=11 // pred_region
        _
      $region20: #{transformer_block_sparse.4} parent=11 // pred_fallthru
        _
      // Predicated region
      $region21: #{transformer_block_sparse.4} parent=11 // pred_check
        %p195 = pneg %p153
      $region22: #{transformer_block_sparse.4} parent=11 // pred_check_branch
        %197 = sbr.rel (%p195) target = $region24
      $region23: #{transformer_block_sparse.4} parent=11 // pred_region
        _
      $region24: #{transformer_block_sparse.4} parent=11 // pred_fallthru
        _
    $region12: #{transformer_block_sparse.4} parent=5 // pred_fallthru
      _
    %p198 = scmp.lt.s32.totalorder %s12, 2
    // Predicated region
    $region25: #{transformer_block_sparse.4} parent=5 // pred_check
      %p199 = pneg %p198
    $region26: #{transformer_block_sparse.4} parent=5 // pred_check_branch
      %201 = sbr.rel (%p199) target = $region28
    $region27: #{transformer_block_sparse.4} parent=5 // pred_region
      // Predicated region
      $region29: #{transformer_block_sparse.4} parent=27 // pred_check
        %p202 = pneg %p32
      $region30: #{transformer_block_sparse.4} parent=27 // pred_check_branch
        %204 = sbr.rel (%p202) target = $region32
      $region31: #{transformer_block_sparse.4} parent=27 // pred_region
        %p205 = scmp.lt.s32.totalorder %s12, 1
        %s206 = scalar_select %p205, %s12, 1
        %s207 = scalar_lea.vmem %s0, %s206
      $region32: #{transformer_block_sparse.4} parent=27 // pred_fallthru
        _
      // Predicated region
      $region33: #{transformer_block_sparse.4} parent=27 // pred_check
        %p208 = pneg %p58
      $region34: #{transformer_block_sparse.4} parent=27 // pred_check_branch
        %210 = sbr.rel (%p208) target = $region36
      $region35: #{transformer_block_sparse.4} parent=27 // pred_region
        %s211 = smul.u32 2, %s12
        %p212 = scmp.lt.s32.totalorder %s211, 3
        %s213 = scalar_select %p212, %s211, 3
        %s214 = smul.addr %s213, 8
        %s215 = scalar_lea.vmem %s1, %s214
        %s216 = smul.u32 2, %s12
      $region36: #{transformer_block_sparse.4} parent=27 // pred_fallthru
        _
      // Predicated region
      $region37: #{transformer_block_sparse.4} parent=27 // pred_check
        %p217 = pneg %p84
      $region38: #{transformer_block_sparse.4} parent=27 // pred_check_branch
        %219 = sbr.rel (%p217) target = $region40
      $region39: #{transformer_block_sparse.4} parent=27 // pred_region
        %s220 = smul.u32 2, %s12
        %p221 = scmp.lt.s32.totalorder %s220, 3
        %s222 = scalar_select %p221, %s220, 3
        %s223 = smul.addr %s222, 8
        %s224 = scalar_lea.vmem %s2, %s223
        %s225 = smul.u32 2, %s12
      $region40: #{transformer_block_sparse.4} parent=27 // pred_fallthru
        _
    $region28: #{transformer_block_sparse.4} parent=5 // pred_fallthru
      _
    %p226 = scmp.le.s32.totalorder 1, %s12
    %p227 = scmp.lt.s32.totalorder %s12, 3
    %p228 = pnand %p226, %p227
    %p229 = pneg %p228
    // Predicated region
    $region41: #{transformer_block_sparse.4} parent=5 // pred_check
      _
    $region42: #{transformer_block_sparse.4} parent=5 // pred_check_branch
      %231 = sbr.rel (%p228) target = $region44
    $region43: #{transformer_block_sparse.4} parent=5 // pred_region
      %s232 = ssub.s32 %s12, 1
      %p233 = scmp.lt.s32.totalorder %s17, 1
      %s234 = scalar_select %p233, %s17, 1
      %s235 = scalar_lea.vmem %s0, %s234
      %p236 = pneg %p38
      %p237 = pneg %p35
      %s238 = smul.u32 2, %s17
      %p239 = scmp.lt.s32.totalorder %s238, 3
      %s240 = scalar_select %p239, %s238, 3
      %s241 = smul.addr %s240, 8
      %s242 = scalar_lea.vmem %s1, %s241
      %p243 = pneg %p64
      %p244 = pneg %p61
      %s245 = smul.u32 2, %s17
      %p246 = scmp.lt.s32.totalorder %s245, 3
      %s247 = scalar_select %p246, %s245, 3
      %s248 = smul.addr %s247, 8
      %s249 = scalar_lea.vmem %s2, %s248
      %p250 = pneg %p90
      %p251 = pneg %p87
      %p252 = pneg %p111
      %p253 = pneg %p108
      %p254 = pneg %p132
      %p255 = pneg %p129
      %p256 = pneg %p153
      %p257 = pneg %p150
      %p258 = pneg %p174
      %p259 = pneg %p171
      %p260 = scmp.lt.s32.totalorder %s17, 1
      %s261 = scalar_select %p260, %s17, 1
      %s262 = scalar_lea.vmem %s0, %s261
      %s263 = smul.u32 2, %s17
      %p264 = scmp.lt.s32.totalorder %s263, 3
      %s265 = scalar_select %p264, %s263, 3
      %s266 = smul.addr %s265, 8
      %s267 = scalar_lea.vmem %s1, %s266
      %s268 = smul.u32 2, %s17
      %s269 = smul.u32 2, %s17
      %p270 = scmp.lt.s32.totalorder %s269, 3
      %s271 = scalar_select %p270, %s269, 3
      %s272 = smul.addr %s271, 8
      %s273 = scalar_lea.vmem %s2, %s272
      %s274 = smul.u32 2, %s17
      %p276 = scmp.eq.s32.totalorder %s17, 0
      // Predicated region
      $region45: #{transformer_block_sparse.4} parent=43 // pred_check
        %p277 = pneg %p276
      $region46: #{transformer_block_sparse.4} parent=43 // pred_check_branch
        %279 = sbr.rel (%p277) target = $region48
      $region47: #{transformer_block_sparse.4} parent=43 // pred_region
        %280 = vst [vmem:[%s6] sm:$0xff] 0.0
        %vm281 = vcmask 31744
        %282 = vst.msk [vmem:[#allocation2] sm:$0xff] %vm281, 0.0
      $region48: #{transformer_block_sparse.4} parent=43 // pred_fallthru
        _
      %v283 = vld [vmem:[%s267] sm:$0xff]
      %v284 = vld [vmem:[%s267 + $0x8] sm:$0xff]
      %v285 = vld [vmem:[%s273] sm:$0xff]
      %v286 = vld [vmem:[%s273 + $0x8] sm:$0xff]
      %v287 = vld [vmem:[%s262] sm:$0x1]
      %v288 = vlaneseq
      %v289 = vand.u32 %v288, 127
      %290 = vset.pattern.permute.xlu0 0
      %291 = vperm.xlu0 %290, %v283
      %v292 = vpop.permute.xlu0 %291
      %293 = vset.pattern.permute.xlu0 0
      %294 = vperm.xlu0 %293, %v284
      %v295 = vpop.permute.xlu0 %294
      %vm296 = vcmp.eq.s32.totalorder %v289, %v292
      %vm297 = vcmp.eq.s32.totalorder %v289, %v295
      %v298 = vsel %vm296, 1, 0
      %v299 = vsel %vm297, 1, 0
      %v300 = vcvt.s32.f32 %v298
      %v301 = vcvt.s32.f32 %v299
      %v302 = vpack.c.bf16 %v301, %v300
      %303 = vset.pattern.permute.xlu0 0
      %304 = vperm.xlu0 %303, %v285
      %v305 = vpop.permute.xlu0 %304
      %306 = vset.pattern.permute.xlu0 0
      %307 = vperm.xlu0 %306, %v286
      %v308 = vpop.permute.xlu0 %307
      %vm309 = vcmp.eq.s32.totalorder %v289, %v305
      %vm310 = vcmp.eq.s32.totalorder %v289, %v308
      %v311 = vsel %vm309, 1, 0
      %v312 = vsel %vm310, 1, 0
      %v313 = vcvt.s32.f32 %v311
      %v314 = vcvt.s32.f32 %v312
      %v315 = vpack.c.bf16 %v314, %v313
      %v316 = vld [vmem:[%s3] sm:$0xf]
      %vm317 = vcmask 64512
      %v319 = vsel %vm317, %v302, 0
      %vm321 = vcmask 1043456
      %v323 = vsel %vm321, %v316, 0
      %325 = vmatpush.bf16.msra.mxu0 0
      %326 = vmatpush.bf16.msra.mxu0 0
      %327 = vmatpush.bf16.msra.mxu0 0
      %328 = vmatpush.bf16.msra.mxu0 0
      %329 = vmatpush.bf16.msra.mxu0 0
      %330 = vmatpush.bf16.msra.mxu0 0
      %331 = vmatpush.bf16.msra.mxu0 0
      %332 = vmatpush.bf16.msra.mxu0 %v323
      %333 = vmatmul.bf16.gmra.mxu0 %v319
      %v334 = vpop.f32.mrf.mxu0
      %v335 = vadd.f32 0.0, %v334
      %v336 = vpop.f32.mrf.mxu0
      %v337 = vadd.f32 0.0, %v336
      %338 = vdwg.mxu0
      %v339 = vld [vmem:[%s3 + $0x4] sm:$0xff]
      %v341 = vunpack.c.l.b16 %v339
      %v342 = vunpack.c.h.b16 %v339
      %v343 = vpack.c.b16 %v341, %v341
      %v344 = vpack.c.b16 %v342, %v342
      %v346 = vsel %vm317, %v315, 0
      %v349 = vsel %vm321, %v343, 0
      %v352 = vsel %vm321, %v344, 0
      %354 = vmatpush.bf16.msra.mxu0 0
      %355 = vmatpush.bf16.msra.mxu0 0
      %356 = vmatpush.bf16.msra.mxu0 0
      %357 = vmatpush.bf16.msra.mxu0 0
      %358 = vmatpush.bf16.msra.mxu0 0
      %359 = vmatpush.bf16.msra.mxu0 0
      %360 = vmatpush.bf16.msra.mxu0 0
      %361 = vmatpush.bf16.msra.mxu0 %v349
      %362 = vmatmul.bf16.gmra.mxu0 %v346
      %v363 = vpop.f32.mrf.mxu0
      %v364 = vadd.f32 0.0, %v363
      %v365 = vpop.f32.mrf.mxu0
      %v366 = vadd.f32 0.0, %v365
      %367 = vdwg.mxu0
      %368 = vmatpush.bf16.msra.mxu0 0
      %369 = vmatpush.bf16.msra.mxu0 0
      %370 = vmatpush.bf16.msra.mxu0 0
      %371 = vmatpush.bf16.msra.mxu0 0
      %372 = vmatpush.bf16.msra.mxu0 0
      %373 = vmatpush.bf16.msra.mxu0 0
      %374 = vmatpush.bf16.msra.mxu0 0
      %375 = vmatpush.bf16.msra.mxu0 %v352
      %376 = vmatmul.bf16.gmra.mxu0 %v346
      %v377 = vpop.f32.mrf.mxu0
      %v378 = vadd.f32 0.0, %v377
      %v379 = vpop.f32.mrf.mxu0
      %v380 = vadd.f32 0.0, %v379
      %381 = vdwg.mxu0
      %v382 = vmul.f32 %v335, %v364
      %v383 = vmul.f32 %v337, %v366
      %v384 = vld [vmem:[%s4] sm:$0xff]
      %v385 = vld [vmem:[%s4 + $0x8] sm:$0xff]
      %v386 = vld [vmem:[%s4 + $0x10] sm:$0xff]
      %v387 = vld [vmem:[%s4 + $0x18] sm:$0xff]
      %v388 = vld [vmem:[%s4 + $0x20] sm:$0xff]
      %v389 = vld [vmem:[%s4 + $0x28] sm:$0xff]
      %v390 = vld [vmem:[%s4 + $0x30] sm:$0xff]
      %v391 = vld [vmem:[%s4 + $0x38] sm:$0xff]
      %v392 = vld [vmem:[%s4 + $0x40] sm:$0xff]
      %v393 = vld [vmem:[%s4 + $0x48] sm:$0xff]
      %v394 = vld [vmem:[%s4 + $0x50] sm:$0xff]
      %v395 = vld [vmem:[%s4 + $0x58] sm:$0xff]
      %v396 = vld [vmem:[%s4 + $0x60] sm:$0xff]
      %v397 = vld [vmem:[%s4 + $0x68] sm:$0xff]
      %v398 = vld [vmem:[%s4 + $0x70] sm:$0xff]
      %v399 = vld [vmem:[%s4 + $0x78] sm:$0xff]
      %400 = vmatpush.msra.mxu0 %v399
      %401 = vmatpush.msra.mxu0 %v398
      %402 = vmatpush.msra.mxu0 %v397
      %403 = vmatpush.msra.mxu0 %v396
      %404 = vmatpush.msra.mxu0 %v395
      %405 = vmatpush.msra.mxu0 %v394
      %406 = vmatpush.msra.mxu0 %v393
      %407 = vmatpush.msra.mxu0 %v392
      %408 = vmatpush.msra.mxu0 %v391
      %409 = vmatpush.msra.mxu0 %v390
      %410 = vmatpush.msra.mxu0 %v389
      %411 = vmatpush.msra.mxu0 %v388
      %412 = vmatpush.msra.mxu0 %v387
      %413 = vmatpush.msra.mxu0 %v386
      %414 = vmatpush.msra.mxu0 %v385
      %415 = vmatpush.msra.mxu0 %v384
      %416 = vmatmul.f32.gmra.mxu0 %v382
      %v417 = vpop.f32.mrf.mxu0
      %v418 = vadd.f32 0.0, %v417
      %419 = vmatmul.f32.gmra.mxu0 %v383
      %v420 = vpop.f32.mrf.mxu0
      %v421 = vadd.f32 0.0, %v420
      %422 = vdwg.mxu0
      %v423 = vmul.f32 %v418, 1.442695
      %v424 = vpow.pop %v423
      %v425 = vmul.f32 %v421, 1.442695
      %v426 = vpow.pop %v425
      %v427 = vld [vmem:[%s5] sm:$0xf]
      %vm428 = vcmask 31744
      %v430 = vsel %vm428, %v424, 0
      %v433 = vsel %vm428, %v426, 0
      %v436 = vsel %vm321, %v427, 0
      %438 = vmatpush.msra.mxu0 0.0
      %439 = vmatpush.msra.mxu0 0.0
      %440 = vmatpush.msra.mxu0 0.0
      %441 = vmatpush.msra.mxu0 0.0
      %442 = vmatpush.msra.mxu0 0.0
      %443 = vmatpush.msra.mxu0 0.0
      %444 = vmatpush.msra.mxu0 0.0
      %445 = vmatpush.msra.mxu0 0.0
      %446 = vmatpush.msra.mxu0 0.0
      %447 = vmatpush.msra.mxu0 0.0
      %448 = vmatpush.msra.mxu0 0.0
      %449 = vmatpush.msra.mxu0 0.0
      %450 = vmatpush.msra.mxu0 0.0
      %451 = vmatpush.msra.mxu0 0.0
      %452 = vmatpush.msra.mxu0 0.0
      %453 = vmatpush.msra.mxu0 %v436
      %454 = vmatmul.f32.gmra.mxu0 %v430
      %v455 = vpop.f32.mrf.mxu0
      %v456 = vadd.f32 0.0, %v455
      %457 = vmatmul.f32.gmra.mxu0 %v433
      %v458 = vpop.f32.mrf.mxu0
      %v459 = vadd.f32 0.0, %v458
      %460 = vdwg.mxu0
      %v461 = vmul.f32 %v456, %v378
      %v462 = vmul.f32 %v459, %v380
      %v463 = vlaneseq
      %v464 = vshrl.u32 %v463, 7
      %v465 = vperm.slane %v287, 0
      %vm466 = vcmp.eq.s32.totalorder %v464, %v465
      %v467 = vsel %vm466, 1, 0
      %v468 = vcvt.s32.f32 %v467
      %v469 = vld [vmem:[%s6] sm:$0xff]
      %vm470 = vcmask 130048
      %v472 = vsel %vm470, %v468, 0
      %474 = vmatpush.msra.mxu0 0.0
      %475 = vmatpush.msra.mxu0 0.0
      %476 = vmatpush.msra.mxu0 0.0
      %477 = vmatpush.msra.mxu0 0.0
      %478 = vmatpush.msra.mxu0 0.0
      %479 = vmatpush.msra.mxu0 0.0
      %480 = vmatpush.msra.mxu0 0.0
      %481 = vmatpush.msra.mxu0 0.0
      %482 = vmatpush.msra.mxu0 0.0
      %483 = vmatpush.msra.mxu0 0.0
      %484 = vmatpush.msra.mxu0 0.0
      %485 = vmatpush.msra.mxu0 0.0
      %486 = vmatpush.msra.mxu0 0.0
      %487 = vmatpush.msra.mxu0 0.0
      %488 = vmatpush.msra.mxu0 %v462
      %489 = vmatpush.msra.mxu0 %v461
      %490 = vmatmul.f32.gmra.mxu0 %v472
      %v491 = vpop.f32.mrf.mxu0
      %v492 = vadd.f32 0.0, %v491
      %493 = vdwg.mxu0
      %v494 = vadd.f32 %v469, %v492
      %495 = vst [vmem:[%s6] sm:$0xff] %v494
      %v496 = vld [vmem:[#allocation2] sm:$0xff]
      %497 = vmatpush.msra.mxu0 0.0
      %498 = vmatpush.msra.mxu0 0.0
      %499 = vmatpush.msra.mxu0 0.0
      %500 = vmatpush.msra.mxu0 0.0
      %501 = vmatpush.msra.mxu0 0.0
      %502 = vmatpush.msra.mxu0 0.0
      %503 = vmatpush.msra.mxu0 0.0
      %504 = vmatpush.msra.mxu0 0.0
      %505 = vmatpush.msra.mxu0 0.0
      %506 = vmatpush.msra.mxu0 0.0
      %507 = vmatpush.msra.mxu0 0.0
      %508 = vmatpush.msra.mxu0 0.0
      %509 = vmatpush.msra.mxu0 0.0
      %510 = vmatpush.msra.mxu0 0.0
      %511 = vmatpush.msra.mxu0 %v426
      %512 = vmatpush.msra.mxu0 %v424
      %513 = vmatmul.f32.gmra.mxu0 %v472
      %v514 = vpop.f32.mrf.mxu0
      %v515 = vadd.f32 0.0, %v514
      %516 = vdwg.mxu0
      %v517 = vadd.f32 %v496, %v515
      %518 = vst.msk [vmem:[#allocation2] sm:$0xff] %vm428, %v517
      %p519 = scmp.eq.s32.totalorder %s17, 1
      // Predicated region
      $region49: #{transformer_block_sparse.4} parent=43 // pred_check
        %p520 = pneg %p519
      $region50: #{transformer_block_sparse.4} parent=43 // pred_check_branch
        %522 = sbr.rel (%p520) target = $region52
      $region51: #{transformer_block_sparse.4} parent=43 // pred_region
        %v523 = vld [vmem:[#allocation2] sm:$0xff]
        %v524 = vld [vmem:[%s5] sm:$0xf]
        %v526 = vsel %vm428, %v523, 0
        %v529 = vsel %vm321, %v524, 0
        %531 = vmatpush.msra.mxu0 0.0
        %532 = vmatpush.msra.mxu0 0.0
        %533 = vmatpush.msra.mxu0 0.0
        %534 = vmatpush.msra.mxu0 0.0
        %535 = vmatpush.msra.mxu0 0.0
        %536 = vmatpush.msra.mxu0 0.0
        %537 = vmatpush.msra.mxu0 0.0
        %538 = vmatpush.msra.mxu0 0.0
        %539 = vmatpush.msra.mxu0 0.0
        %540 = vmatpush.msra.mxu0 0.0
        %541 = vmatpush.msra.mxu0 0.0
        %542 = vmatpush.msra.mxu0 0.0
        %543 = vmatpush.msra.mxu0 0.0
        %544 = vmatpush.msra.mxu0 0.0
        %545 = vmatpush.msra.mxu0 0.0
        %546 = vmatpush.msra.mxu0 %v529
        %547 = vmatmul.f32.gmra.mxu0 %v526
        %v548 = vpop.f32.mrf.mxu0
        %v549 = vadd.f32 0.0, %v548
        %550 = vdwg.mxu0
        %vm551 = vcmp.gt.f32.partialorder %v549, 0.0
        %v552 = vrcp.pop %v549
        %v553 = vmul.f32 %v549, %v552
        %v554 = vsub.f32 1.0, %v553
        %v555 = vmul.f32 %v552, %v554
        %v556 = vadd.f32 %v552, %v555
        %vm557 = vweird.f32 %v549
        %vm558 = vweird.f32 %v552
        %vm559 = vmor %vm557, %vm558
        %v560 = vsel %vm559, %v552, %v556
        %v561 = vand.u32 2147483647, %v549
        %vm562 = vcmp.eq.f32.partialorder %v561, 8.507059e+37
        %v563 = vand.u32 %v549, 2147483648
        %v564 = vor.u32 1.1754944e-38, %v563
        %v565 = vsel %vm562, %v564, %v560
        %v566 = vmul.f32 1.0, %v565
        %v567 = vsel %vm551, %v566, 0.0
        %v568 = vld [vmem:[%s6] sm:$0xff]
        %v569 = vmul.f32 %v568, %v567
        %570 = vst [vmem:[%s6] sm:$0xff] %v569
      $region52: #{transformer_block_sparse.4} parent=43 // pred_fallthru
        _
      // Predicated region
      $region53: #{transformer_block_sparse.4} parent=43 // pred_check
        %p571 = pneg %p171
      $region54: #{transformer_block_sparse.4} parent=43 // pred_check_branch
        %573 = sbr.rel (%p571) target = $region56
      $region55: #{transformer_block_sparse.4} parent=43 // pred_region
        _
      $region56: #{transformer_block_sparse.4} parent=43 // pred_fallthru
        _
      // Predicated region
      $region57: #{transformer_block_sparse.4} parent=43 // pred_check
        %p574 = pneg %p171
      $region58: #{transformer_block_sparse.4} parent=43 // pred_check_branch
        %576 = sbr.rel (%p574) target = $region60
      $region59: #{transformer_block_sparse.4} parent=43 // pred_region
        _
      $region60: #{transformer_block_sparse.4} parent=43 // pred_fallthru
        _
    $region44: #{transformer_block_sparse.4} parent=5 // pred_fallthru
      _
    %p577 = scmp.le.s32.totalorder 2, %s12
    // Predicated region
    $region61: #{transformer_block_sparse.4} parent=5 // pred_check
      %p578 = pneg %p577
    $region62: #{transformer_block_sparse.4} parent=5 // pred_check_branch
      %580 = sbr.rel (%p578) target = $region64
    $region63: #{transformer_block_sparse.4} parent=5 // pred_region
      %s581 = ssub.s32 %s12, 2
    $region64: #{transformer_block_sparse.4} parent=5 // pred_fallthru
      _
  $region6: #{transformer_block_sparse.4} parent=0 // loop_footer
    %s16 = sadd.s32 1, %s12
  $region7: #{transformer_block_sparse.4} parent=0 // loop_footer_branch
    %11 = sbr.rel target = $region3
  $region8: #{transformer_block_sparse.4} parent=0 // loop_exit
    _

// kernel: transformer_block_sparse.5
$region0: #{transformer_block_sparse.5}
  #allocation0 [shape = 'u32[]', space=smem, size = 0x4, offset = 0x4, fixed_abs, tag = 'smem constant byte address 0x4 - core index']
  #allocation1 [shape = 'u32[72,128]{1,0:T(1,128)}', space=vmem, size = 0x9000, scoped, tag = 'internal scratch']
  %s0 = inlined_call_operand.vmem [shape: f32[8,128], index: 0, kind: input, shape index: {}]
  %s1 = inlined_call_operand.vmem [shape: f32[8,128], index: 1, kind: input, shape index: {}]
  %s2 = inlined_call_operand.vmem [shape: bf16[128,128], index: 2, kind: input, shape index: {}]
  %s3 = inlined_call_operand.vmem [shape: bf16[128,128], index: 3, kind: input, shape index: {}]
  %s4 = inlined_call_operand.vmem [shape: f32[8,128], index: 4, kind: input, shape index: {}]
  %s5 = inlined_call_operand.hbm [shape: f32[8,128], index: 5, kind: output, shape index: {}]
  %s6 = sld [smem:[#allocation0]]
  $region30: #{transformer_block_sparse.5} parent=0
    _
  %s8 = ssub.s32 1, %s6
  %s9 = scalar_select 0, %s8, %s6
  $region1: #{transformer_block_sparse.5} parent=0
    #allocation2 [shape = 'u8[4096]{0}', space=vmem, size = 0x1000, scoped, tag = 'output window, operand 0, single buffered']
    #allocation3 [shape = 's32[1]{0}', space=sflag, size = 0x4, scoped, tag = 'scoped memory for transformer_block_sparse.5']
    %10 = vsyncpa [#allocation3], 0
    // Predicated region
    $region2: #{transformer_block_sparse.5} parent=1 // pred_check
      _
    $region3: #{transformer_block_sparse.5} parent=1 // pred_check_branch
      %12 = sbr.rel (0) target = $region5
    $region4: #{transformer_block_sparse.5} parent=1 // pred_region
      _
    $region5: #{transformer_block_sparse.5} parent=1 // pred_fallthru
      _
    // Predicated region
    $region6: #{transformer_block_sparse.5} parent=1 // pred_check
      _
    $region7: #{transformer_block_sparse.5} parent=1 // pred_check_branch
      %14 = sbr.rel (0) target = $region9
    $region8: #{transformer_block_sparse.5} parent=1 // pred_region
      _
    $region9: #{transformer_block_sparse.5} parent=1 // pred_fallthru
      _
    // Predicated region
    $region10: #{transformer_block_sparse.5} parent=1 // pred_check
      _
    $region11: #{transformer_block_sparse.5} parent=1 // pred_check_branch
      %16 = sbr.rel (0) target = $region13
    $region12: #{transformer_block_sparse.5} parent=1 // pred_region
      _
    $region13: #{transformer_block_sparse.5} parent=1 // pred_fallthru
      _
    // Predicated region
    $region14: #{transformer_block_sparse.5} parent=1 // pred_check
      _
    $region15: #{transformer_block_sparse.5} parent=1 // pred_check_branch
      %18 = sbr.rel (0) target = $region17
    $region16: #{transformer_block_sparse.5} parent=1 // pred_region
      _
    $region17: #{transformer_block_sparse.5} parent=1 // pred_fallthru
      _
    // Predicated region
    $region18: #{transformer_block_sparse.5} parent=1 // pred_check
      _
    $region19: #{transformer_block_sparse.5} parent=1 // pred_check_branch
      %20 = sbr.rel (0) target = $region21
    $region20: #{transformer_block_sparse.5} parent=1 // pred_region
      _
    $region21: #{transformer_block_sparse.5} parent=1 // pred_fallthru
      _
    %v21 = vld [vmem:[%s4] sm:$0xff]
    %v22 = vld [vmem:[%s0] sm:$0xff]
    %v23 = vld [vmem:[%s1] sm:$0xff]
    %v24 = vadd.f32 %v22, %v23
    %25 = vadd.xlane.f32.xlu0 %v24
    %v26 = vpop.xlane.xlu0 %25
    %v27 = vrcp.pop 128.0
    %v28 = vmul.f32 128.0, %v27
    %v29 = vsub.f32 1.0, %v28
    %v30 = vmul.f32 %v27, %v29
    %v31 = vadd.f32 %v27, %v30
    %vm32 = vweird.f32 %v27
    %v33 = vsel %vm32, %v27, %v31
    %v34 = vmul.f32 %v26, %v33
    %v35 = vsub.f32 %v24, %v34
    %v36 = vmul.f32 %v35, %v35
    %37 = vadd.xlane.f32.xlu0 %v36
    %v38 = vpop.xlane.xlu0 %37
    %v39 = vmul.f32 %v38, %v33
    %v40 = vadd.f32 %v39, 1e-05
    %v41 = vrsqrt.pop %v40
    %v42 = vmul.f32 %v41, %v40
    %v43 = vmul.f32 %v42, %v41
    %v44 = vmul.f32 0.5, %v43
    %v45 = vsub.f32 1.5, %v44
    %v46 = vmul.f32 %v41, %v45
    %vm47 = vweird.f32 %v40
    %vm48 = vweird.f32 %v41
    %vm49 = vmor %vm47, %vm48
    %v50 = vsel %vm49, %v41, %v46
    %v51 = vmul.f32 %v35, %v50
    %v52 = vperm.slane %v21, 0
    %v53 = vmul.f32 %v51, %v52
    %v54 = vperm.slane %v21, 1
    %v55 = vadd.f32 %v53, %v54
    %v56 = vpack.c.bf16 %v55, %v55
    %v57 = vld [vmem:[%s2] sm:$0xf]
    %v58 = vld [vmem:[%s2 + $0x4] sm:$0xf]
    %v59 = vld [vmem:[%s2 + $0x8] sm:$0xf]
    %v60 = vld [vmem:[%s2 + $0xc] sm:$0xf]
    %v61 = vld [vmem:[%s2 + $0x10] sm:$0xf]
    %v62 = vld [vmem:[%s2 + $0x14] sm:$0xf]
    %v63 = vld [vmem:[%s2 + $0x18] sm:$0xf]
    %v64 = vld [vmem:[%s2 + $0x1c] sm:$0xf]
    %v65 = vld [vmem:[%s2 + $0x20] sm:$0xf]
    %v66 = vld [vmem:[%s2 + $0x24] sm:$0xf]
    %v67 = vld [vmem:[%s2 + $0x28] sm:$0xf]
    %v68 = vld [vmem:[%s2 + $0x2c] sm:$0xf]
    %v69 = vld [vmem:[%s2 + $0x30] sm:$0xf]
    %v70 = vld [vmem:[%s2 + $0x34] sm:$0xf]
    %v71 = vld [vmem:[%s2 + $0x38] sm:$0xf]
    %v72 = vld [vmem:[%s2 + $0x3c] sm:$0xf]
    %v73 = vperm.slane %v21, 2
    %v90 = vunpack.c.l.b16 %v57
    %v91 = vunpack.c.l.b16 %v58
    %v92 = vunpack.c.l.b16 %v59
    %v93 = vunpack.c.l.b16 %v60
    %v94 = vunpack.c.l.b16 %v61
    %v95 = vunpack.c.l.b16 %v62
    %v96 = vunpack.c.l.b16 %v63
    %v97 = vunpack.c.l.b16 %v64
    %v98 = vunpack.c.l.b16 %v65
    %v99 = vunpack.c.l.b16 %v66
    %v100 = vunpack.c.l.b16 %v67
    %v101 = vunpack.c.l.b16 %v68
    %v102 = vunpack.c.l.b16 %v69
    %v103 = vunpack.c.l.b16 %v70
    %v104 = vunpack.c.l.b16 %v71
    %v105 = vunpack.c.l.b16 %v72
    %v106 = vpack.c.b16 %v91, %v90
    %v107 = vpack.c.b16 %v93, %v92
    %v108 = vpack.c.b16 %v95, %v94
    %v109 = vpack.c.b16 %v97, %v96
    %v110 = vpack.c.b16 %v99, %v98
    %v111 = vpack.c.b16 %v101, %v100
    %v112 = vpack.c.b16 %v103, %v102
    %v113 = vpack.c.b16 %v105, %v104
    %122 = vmatpush.bf16.msra.mxu0 %v113
    %123 = vmatpush.bf16.msra.mxu0 %v112
    %124 = vmatpush.bf16.msra.mxu0 %v111
    %125 = vmatpush.bf16.msra.mxu0 %v110
    %126 = vmatpush.bf16.msra.mxu0 %v109
    %127 = vmatpush.bf16.msra.mxu0 %v108
    %128 = vmatpush.bf16.msra.mxu0 %v107
    %129 = vmatpush.bf16.msra.mxu0 %v106
    %130 = vmatmul.bf16.gmra.mxu0 %v56
    %v131 = vpop.f32.mrf.mxu0
    %v132 = vadd.f32 %v73, %v131
    %v133 = vpop.f32.mrf.mxu0
    %134 = vdwg.mxu0
    %v135 = vmax.f32 %v132, 0.0
    %v136 = vpack.c.bf16 %v135, %v135
    %v137 = vld [vmem:[%s3] sm:$0xf]
    %v138 = vld [vmem:[%s3 + $0x4] sm:$0xf]
    %v139 = vld [vmem:[%s3 + $0x8] sm:$0xf]
    %v140 = vld [vmem:[%s3 + $0xc] sm:$0xf]
    %v141 = vld [vmem:[%s3 + $0x10] sm:$0xf]
    %v142 = vld [vmem:[%s3 + $0x14] sm:$0xf]
    %v143 = vld [vmem:[%s3 + $0x18] sm:$0xf]
    %v144 = vld [vmem:[%s3 + $0x1c] sm:$0xf]
    %v145 = vld [vmem:[%s3 + $0x20] sm:$0xf]
    %v146 = vld [vmem:[%s3 + $0x24] sm:$0xf]
    %v147 = vld [vmem:[%s3 + $0x28] sm:$0xf]
    %v148 = vld [vmem:[%s3 + $0x2c] sm:$0xf]
    %v149 = vld [vmem:[%s3 + $0x30] sm:$0xf]
    %v150 = vld [vmem:[%s3 + $0x34] sm:$0xf]
    %v151 = vld [vmem:[%s3 + $0x38] sm:$0xf]
    %v152 = vld [vmem:[%s3 + $0x3c] sm:$0xf]
    %v153 = vperm.slane %v21, 3
    %v170 = vunpack.c.l.b16 %v137
    %v171 = vunpack.c.l.b16 %v138
    %v172 = vunpack.c.l.b16 %v139
    %v173 = vunpack.c.l.b16 %v140
    %v174 = vunpack.c.l.b16 %v141
    %v175 = vunpack.c.l.b16 %v142
    %v176 = vunpack.c.l.b16 %v143
    %v177 = vunpack.c.l.b16 %v144
    %v178 = vunpack.c.l.b16 %v145
    %v179 = vunpack.c.l.b16 %v146
    %v180 = vunpack.c.l.b16 %v147
    %v181 = vunpack.c.l.b16 %v148
    %v182 = vunpack.c.l.b16 %v149
    %v183 = vunpack.c.l.b16 %v150
    %v184 = vunpack.c.l.b16 %v151
    %v185 = vunpack.c.l.b16 %v152
    %v186 = vpack.c.b16 %v171, %v170
    %v187 = vpack.c.b16 %v173, %v172
    %v188 = vpack.c.b16 %v175, %v174
    %v189 = vpack.c.b16 %v177, %v176
    %v190 = vpack.c.b16 %v179, %v178
    %v191 = vpack.c.b16 %v181, %v180
    %v192 = vpack.c.b16 %v183, %v182
    %v193 = vpack.c.b16 %v185, %v184
    %202 = vmatpush.bf16.msra.mxu0 %v193
    %203 = vmatpush.bf16.msra.mxu0 %v192
    %204 = vmatpush.bf16.msra.mxu0 %v191
    %205 = vmatpush.bf16.msra.mxu0 %v190
    %206 = vmatpush.bf16.msra.mxu0 %v189
    %207 = vmatpush.bf16.msra.mxu0 %v188
    %208 = vmatpush.bf16.msra.mxu0 %v187
    %209 = vmatpush.bf16.msra.mxu0 %v186
    %210 = vmatmul.bf16.gmra.mxu0 %v136
    %v211 = vpop.f32.mrf.mxu0
    %v212 = vadd.f32 %v153, %v211
    %v213 = vpop.f32.mrf.mxu0
    %214 = vdwg.mxu0
    %v215 = vadd.f32 %v55, %v212
    %216 = vadd.xlane.f32.xlu0 %v215
    %v217 = vpop.xlane.xlu0 %216
    %v218 = vmul.f32 %v217, %v33
    %v219 = vsub.f32 %v215, %v218
    %v220 = vmul.f32 %v219, %v219
    %221 = vadd.xlane.f32.xlu0 %v220
    %v222 = vpop.xlane.xlu0 %221
    %v223 = vmul.f32 %v222, %v33
    %v224 = vadd.f32 %v223, 1e-05
    %v225 = vrsqrt.pop %v224
    %v226 = vmul.f32 %v225, %v224
    %v227 = vmul.f32 %v226, %v225
    %v228 = vmul.f32 0.5, %v227
    %v229 = vsub.f32 1.5, %v228
    %v230 = vmul.f32 %v225, %v229
    %vm231 = vweird.f32 %v224
    %vm232 = vweird.f32 %v225
    %vm233 = vmor %vm231, %vm232
    %v234 = vsel %vm233, %v225, %v230
    %v235 = vmul.f32 %v219, %v234
    %v236 = vperm.slane %v21, 4
    %v237 = vmul.f32 %v235, %v236
    %v238 = vperm.slane %v21, 5
    %v239 = vadd.f32 %v237, %v238
    %240 = vst [vmem:[#allocation2] sm:$0xff] %v239
    // Predicated region
    $region22: #{transformer_block_sparse.5} parent=1 // pred_check
      _
    $region23: #{transformer_block_sparse.5} parent=1 // pred_check_branch
      %242 = sbr.rel (0) target = $region25
    $region24: #{transformer_block_sparse.5} parent=1 // pred_region
      %244 = vsyncadd [#allocation3], 0
      %s246 = sshll.u32 [#allocation2], 4
      %s247 = int_to_ptr.vmem [resolvable:$true] %s246
      %s248 = sshll.u32 %s5, 4
      %s249 = int_to_ptr.hbm [resolvable:$true] %s248
      %251 = dma.vmem_to_hbm [thread:$0]  %s247, 128, %s249, [#allocation3]
    $region25: #{transformer_block_sparse.5} parent=1 // pred_fallthru
      _
    // Predicated region
    $region26: #{transformer_block_sparse.5} parent=1 // pred_check
      _
    $region27: #{transformer_block_sparse.5} parent=1 // pred_check_branch
      %253 = sbr.rel (0) target = $region29
    $region28: #{transformer_block_sparse.5} parent=1 // pred_region
      %255 = dma.done [#allocation3], 128
    $region29: #{transformer_block_sparse.5} parent=1 // pred_fallthru
      _
    %256 = vsyncpa [#allocation3], 1

</llo_original>
